<compile_context>
chip_gen: v7x
topology: tpu7x:2x2x1
jax: 0.10.0
libtpu: 0.0.40
codegen_flags: <defaults>
</compile_context>

<pallas_src>
import functools

import jax
import jax.numpy as jnp
from jax.experimental import pallas as pl
from jax.experimental.pallas import tpu as pltpu

K_RAW = 28 * 28    # 784 flattened pixels (== full last dim of x_flat)
H = 512
N_OUT = 10
N_PAD = 128        # lane-dense padded logit width; real logits are [:, :10]
MAX_TILE_B = 512   # upper bound on rows per grid step


def _round_up(x, m):
    return (x + m - 1) // m * m


def _choose_tiling(batch):
    """Return (tile_b, padded_batch).

    - rows padded to a multiple of 16 (bf16 sublane packing)
    - >= 2 grid steps once batch >= 256 (v7x megacore gets both TensorCores)
    - tile capped at MAX_TILE_B rows
    """
    b16 = _round_up(max(batch, 1), 16)
    n_steps = max(1, pl.cdiv(b16, MAX_TILE_B))
    if b16 >= 256:
        n_steps = max(2, n_steps)
    tile_b = _round_up(pl.cdiv(b16, n_steps), 16)
    return tile_b, n_steps * tile_b


def mlp_kernel(x_ref, w1_ref, b1_ref, w2_ref, b2_ref, w3_ref, b3_ref, o_ref):
    # x: (tile_b, 784) f32; w1: (784, 512) bf16; w2: (512, 512) bf16;
    # w3: (512, 128) bf16 (cols 10..127 zero); biases f32 (1, N).
    # MXU matmuls: bf16 operands, f32 accumulation. Epilogues in f32 on the VPU.
    x = x_ref[...].astype(jnp.bfloat16)
    h1 = jnp.dot(x, w1_ref[...], preferred_element_type=jnp.float32)
    h1 = jnp.maximum(h1 + b1_ref[...], 0.0)                        # Linear+ReLU
    h2 = jnp.dot(h1.astype(jnp.bfloat16), w2_ref[...],
                 preferred_element_type=jnp.float32)
    h2 = jnp.maximum(h2 + b2_ref[...], 0.0)                        # Linear+ReLU
    logits = jnp.dot(h2.astype(jnp.bfloat16), w3_ref[...],
                     preferred_element_type=jnp.float32)
    o_ref[...] = (logits + b3_ref[...]).astype(o_ref.dtype)        # final Linear


@jax.jit
def _forward(x_flat, w1, b1, w2, b2, w3, b3):
    batch = x_flat.shape[0]
    tile_b, b_pad = _choose_tiling(batch)
    if b_pad != batch:
        x_flat = jnp.pad(x_flat, ((0, b_pad - batch), (0, 0)))
    grid = (b_pad // tile_b,)

    const = lambda r, c: pl.BlockSpec((r, c), lambda i: (0, 0))
    cost = pl.CostEstimate(
        flops=2 * b_pad * (K_RAW * H + H * H + H * N_PAD),
        transcendentals=0,
        bytes_accessed=(b_pad * K_RAW * 4                         # x (f32)
                        + (K_RAW * H + H * H + H * N_PAD) * 2     # weights bf16
                        + (2 * H + N_PAD) * 4                     # biases f32
                        + b_pad * N_PAD * 2),                     # out bf16
    )

    out_pad = pl.pallas_call(
        mlp_kernel,
        out_shape=jax.ShapeDtypeStruct((b_pad, N_PAD), jnp.bfloat16),
        grid=grid,
        in_specs=[
            pl.BlockSpec((tile_b, K_RAW), lambda i: (i, 0)),  # x: batch-tiled
            const(K_RAW, H), const(1, H),                     # layer 1 (resident)
            const(H, H), const(1, H),                         # layer 2 (resident)
            const(H, N_PAD), const(1, N_PAD),                 # layer 3 (resident)
        ],
        out_specs=pl.BlockSpec((tile_b, N_PAD), lambda i: (i, 0)),
        compiler_params=pltpu.CompilerParams(
            dimension_semantics=("parallel",),
            vmem_limit_bytes=32 * 1024 * 1024,
        ),
        cost_estimate=cost,
    )(x_flat, w1, b1, w2, b2, w3, b3)

    return out_pad[:batch, :N_OUT].astype(jnp.float32)


def prepare_params(params):
    """One-time cast/pad of f32 params to the kernel layout (call once, reuse)."""
    w1, b1, w2, b2, w3, b3 = params
    w1b = w1.astype(jnp.bfloat16)                                   # (784, 512)
    w2b = w2.astype(jnp.bfloat16)                                   # (512, 512)
    w3p = jnp.zeros((H, N_PAD), jnp.bfloat16).at[:, :N_OUT].set(
        w3.astype(jnp.bfloat16))                                    # (512, 128)
    b1f = b1.reshape(1, H).astype(jnp.float32)
    b2f = b2.reshape(1, H).astype(jnp.float32)
    b3p = jnp.zeros((1, N_PAD), jnp.float32).at[:, :N_OUT].set(
        b3.reshape(1, N_OUT).astype(jnp.float32))
    return w1b, b1f, w2b, b2f, w3p, b3p


def neural_network_forward(x, prepared_params):
    """x: (B, 1, 28, 28) float32 NCHW. Returns logits (B, 10) float32."""
    batch = x.shape[0]
    x_flat = x.reshape(batch, K_RAW)   # nn.Flatten()
    # The reference forward does `print(x.shape)` here; omitted so that the
    # script's stdout is exactly the KERNEL_OK success marker.
    return _forward(x_flat, *prepared_params)


# TODO(synk): cross-call weight-prefetch future (P10) is still not implemented;
# at tiny batch, per-call latency remains bounded by the ~1.5 MiB weight DMA.


def init_params(key):
    """PyTorch nn.Linear default init: U[-1/sqrt(fan_in), +1/sqrt(fan_in)]."""
    def linear(key, fan_in, fan_out):
        kw, kb = jax.random.split(key)
        bound = 1.0 / jnp.sqrt(fan_in)
        w = jax.random.uniform(kw, (fan_in, fan_out), jnp.float32, -bound, bound)
        b = jax.random.uniform(kb, (1, fan_out), jnp.float32, -bound, bound)
        return w, b

    k1, k2, k3 = jax.random.split(key, 3)
    w1, b1 = linear(k1, K_RAW, H)
    w2, b2 = linear(k2, H, H)
    w3, b3 = linear(k3, H, N_OUT)
    return w1, b1, w2, b2, w3, b3


def _reference_bf16(x, params):
    """Precision-matched reference (bf16 operands, f32 accumulation)."""
    w1, b1, w2, b2, w3, b3 = params
    xf = x.reshape(x.shape[0], -1).astype(jnp.bfloat16)
    h = jax.lax.dot(xf, w1.astype(jnp.bfloat16),
                    preferred_element_type=jnp.float32)
    h = jnp.maximum(h + b1, 0.0)
    h = jax.lax.dot(h.astype(jnp.bfloat16), w2.astype(jnp.bfloat16),
                    preferred_element_type=jnp.float32)
    h = jnp.maximum(h + b2, 0.0)
    h = jax.lax.dot(h.astype(jnp.bfloat16), w3.astype(jnp.bfloat16),
                    preferred_element_type=jnp.float32)
    return h + b3


if __name__ == "__main__":
    key = jax.random.PRNGKey(0)
    k_x, k_p, k_x2 = jax.random.split(key, 3)

    params = init_params(k_p)
    prepared = jax.block_until_ready(prepare_params(params))  # pad/cast once

    # Small-batch case (single grid step).
    B = 8
    x = jax.random.normal(k_x, (B, 1, 28, 28), dtype=jnp.float32)
    logits = neural_network_forward(x, prepared)
    jax.block_until_ready(logits)
    assert logits.shape == (B, N_OUT)
    assert jnp.allclose(logits, _reference_bf16(x, params), atol=2e-2, rtol=2e-2)

    # Loose sanity check against the pure-f32 math of the PyTorch module.
    w1, b1, w2, b2, w3, b3 = params
    xf = x.reshape(B, -1)
    ref32 = jnp.maximum(xf @ w1 + b1, 0.0)
    ref32 = jnp.maximum(ref32 @ w2 + b2, 0.0)
    ref32 = ref32 @ w3 + b3
    assert jnp.allclose(logits, ref32, atol=1e-1, rtol=1e-1)

    # Multi-tile case: batch 260 -> padded 288, grid of 2 (exercises the batch
    # tiling, padding/slicing, and the v7x two-TensorCore split path).
    B2 = 260
    x2 = jax.random.normal(k_x2, (B2, 1, 28, 28), dtype=jnp.float32)
    logits2 = neural_network_forward(x2, prepared)
    jax.block_until_ready(logits2)
    assert logits2.shape == (B2, N_OUT)
    assert jnp.allclose(logits2, _reference_bf16(x2, params),
                        atol=2e-2, rtol=2e-2)

    print("KERNEL_OK")
</pallas_src>

<mosaic_0001>
module attributes {stable_mosaic.version = 11 : i64} {
  func.func @mlp_kernel(%arg0: i32, %arg1: memref<16x784xf32, #tpu.memory_space<vmem>>, %arg2: memref<784x512xbf16, #tpu.memory_space<vmem>>, %arg3: memref<1x512xf32, #tpu.memory_space<vmem>>, %arg4: memref<512x512xbf16, #tpu.memory_space<vmem>>, %arg5: memref<1x512xf32, #tpu.memory_space<vmem>>, %arg6: memref<512x128xbf16, #tpu.memory_space<vmem>>, %arg7: memref<1x128xf32, #tpu.memory_space<vmem>>, %arg8: memref<16x128xbf16, #tpu.memory_space<vmem>>) attributes {dimension_semantics = [#tpu.dimension_semantics<parallel>], iteration_bounds = array<i64: 1>, scalar_prefetch = 0 : i64, scratch_operands = 0 : i64, tpu.core_type = #tpu.core_type<tc>, window_params = [{transform_indices = @transform_0, window_bounds = array<i64: 16, 784>}, {pipeline_mode = #tpu.pipeline_mode<synchronous>, transform_indices = @transform_1, window_bounds = array<i64: 784, 512>}, {pipeline_mode = #tpu.pipeline_mode<synchronous>, transform_indices = @transform_2, window_bounds = array<i64: 1, 512>}, {pipeline_mode = #tpu.pipeline_mode<synchronous>, transform_indices = @transform_3, window_bounds = array<i64: 512, 512>}, {pipeline_mode = #tpu.pipeline_mode<synchronous>, transform_indices = @transform_4, window_bounds = array<i64: 1, 512>}, {pipeline_mode = #tpu.pipeline_mode<synchronous>, transform_indices = @transform_5, window_bounds = array<i64: 512, 128>}, {pipeline_mode = #tpu.pipeline_mode<synchronous>, transform_indices = @transform_6, window_bounds = array<i64: 1, 128>}, {transform_indices = @transform_7, window_bounds = array<i64: 16, 128>}]} {
    %c0 = arith.constant 0 : index
    %c0_0 = arith.constant 0 : index
    %0 = vector.load %arg1[%c0, %c0_0] : memref<16x784xf32, #tpu.memory_space<vmem>>, vector<16x784xf32>
    %1 = arith.truncf %0 : vector<16x784xf32> to vector<16x784xbf16>
    %c0_1 = arith.constant 0 : index
    %c0_2 = arith.constant 0 : index
    %2 = vector.load %arg2[%c0_1, %c0_2] : memref<784x512xbf16, #tpu.memory_space<vmem>>, vector<784x512xbf16>
    %cst = arith.constant dense<0.000000e+00> : vector<16x512xf32>
    %3 = tpu.matmul %1, %2, %cst {dimension_numbers = #tpu.dot_dimension_numbers<[1], [0], [0], [1], [0, 0, 1, 1], [], []>} : vector<16x784xbf16>, vector<784x512xbf16>, vector<16x512xf32> -> vector<16x512xf32>
    %c0_3 = arith.constant 0 : index
    %c0_4 = arith.constant 0 : index
    %4 = vector.load %arg3[%c0_3, %c0_4] : memref<1x512xf32, #tpu.memory_space<vmem>>, vector<1x512xf32>
    %5 = vector.broadcast %4 : vector<1x512xf32> to vector<16x512xf32>
    %6 = arith.addf %3, %5 : vector<16x512xf32>
    %cst_5 = arith.constant 0.000000e+00 : f32
    %7 = vector.broadcast %cst_5 : f32 to vector<16x512xf32>
    %8 = arith.maximumf %6, %7 : vector<16x512xf32>
    %9 = arith.truncf %8 : vector<16x512xf32> to vector<16x512xbf16>
    %c0_6 = arith.constant 0 : index
    %c0_7 = arith.constant 0 : index
    %10 = vector.load %arg4[%c0_6, %c0_7] : memref<512x512xbf16, #tpu.memory_space<vmem>>, vector<512x512xbf16>
    %cst_8 = arith.constant dense<0.000000e+00> : vector<16x512xf32>
    %11 = tpu.matmul %9, %10, %cst_8 {dimension_numbers = #tpu.dot_dimension_numbers<[1], [0], [0], [1], [0, 0, 1, 1], [], []>} : vector<16x512xbf16>, vector<512x512xbf16>, vector<16x512xf32> -> vector<16x512xf32>
    %c0_9 = arith.constant 0 : index
    %c0_10 = arith.constant 0 : index
    %12 = vector.load %arg5[%c0_9, %c0_10] : memref<1x512xf32, #tpu.memory_space<vmem>>, vector<1x512xf32>
    %13 = vector.broadcast %12 : vector<1x512xf32> to vector<16x512xf32>
    %14 = arith.addf %11, %13 : vector<16x512xf32>
    %cst_11 = arith.constant 0.000000e+00 : f32
    %15 = vector.broadcast %cst_11 : f32 to vector<16x512xf32>
    %16 = arith.maximumf %14, %15 : vector<16x512xf32>
    %17 = arith.truncf %16 : vector<16x512xf32> to vector<16x512xbf16>
    %c0_12 = arith.constant 0 : index
    %c0_13 = arith.constant 0 : index
    %18 = vector.load %arg6[%c0_12, %c0_13] : memref<512x128xbf16, #tpu.memory_space<vmem>>, vector<512x128xbf16>
    %cst_14 = arith.constant dense<0.000000e+00> : vector<16x128xf32>
    %19 = tpu.matmul %17, %18, %cst_14 {dimension_numbers = #tpu.dot_dimension_numbers<[1], [0], [0], [1], [0, 0, 1, 1], [], []>} : vector<16x512xbf16>, vector<512x128xbf16>, vector<16x128xf32> -> vector<16x128xf32>
    %c0_15 = arith.constant 0 : index
    %c0_16 = arith.constant 0 : index
    %20 = vector.load %arg7[%c0_15, %c0_16] : memref<1x128xf32, #tpu.memory_space<vmem>>, vector<1x128xf32>
    %21 = vector.broadcast %20 : vector<1x128xf32> to vector<16x128xf32>
    %22 = arith.addf %19, %21 : vector<16x128xf32>
    %23 = arith.truncf %22 : vector<16x128xf32> to vector<16x128xbf16>
    %c0_17 = arith.constant 0 : index
    %c0_18 = arith.constant 0 : index
    %24 = vector.load %arg8[%c0_17, %c0_18] : memref<16x128xbf16, #tpu.memory_space<vmem>>, vector<16x128xbf16>
    tpu.vector_store %arg8[%c0_17, %c0_18], %23 {strides = array<i32>} : memref<16x128xbf16, #tpu.memory_space<vmem>>, vector<16x128xbf16>,
    return
  }
  func.func @transform_0(%arg0: i32) -> (i32, i32) {
    %c0_i32 = arith.constant 0 : i32
    %c0_i32_0 = arith.constant 0 : i32
    return %arg0, %c0_i32 : i32, i32
  }
  func.func @transform_1(%arg0: i32) -> (i32, i32) {
    %c0_i32 = arith.constant 0 : i32
    %c0_i32_0 = arith.constant 0 : i32
    %c0_i32_1 = arith.constant 0 : i32
    return %c0_i32, %c0_i32_0 : i32, i32
  }
  func.func @transform_2(%arg0: i32) -> (i32, i32) {
    %c0_i32 = arith.constant 0 : i32
    %c0_i32_0 = arith.constant 0 : i32
    %c0_i32_1 = arith.constant 0 : i32
    return %c0_i32, %c0_i32_0 : i32, i32
  }
  func.func @transform_3(%arg0: i32) -> (i32, i32) {
    %c0_i32 = arith.constant 0 : i32
    %c0_i32_0 = arith.constant 0 : i32
    %c0_i32_1 = arith.constant 0 : i32
    return %c0_i32, %c0_i32_0 : i32, i32
  }
  func.func @transform_4(%arg0: i32) -> (i32, i32) {
    %c0_i32 = arith.constant 0 : i32
    %c0_i32_0 = arith.constant 0 : i32
    %c0_i32_1 = arith.constant 0 : i32
    return %c0_i32, %c0_i32_0 : i32, i32
  }
  func.func @transform_5(%arg0: i32) -> (i32, i32) {
    %c0_i32 = arith.constant 0 : i32
    %c0_i32_0 = arith.constant 0 : i32
    %c0_i32_1 = arith.constant 0 : i32
    return %c0_i32, %c0_i32_0 : i32, i32
  }
  func.func @transform_6(%arg0: i32) -> (i32, i32) {
    %c0_i32 = arith.constant 0 : i32
    %c0_i32_0 = arith.constant 0 : i32
    %c0_i32_1 = arith.constant 0 : i32
    return %c0_i32, %c0_i32_0 : i32, i32
  }
  func.func @transform_7(%arg0: i32) -> (i32, i32) {
    %c0_i32 = arith.constant 0 : i32
    %c0_i32_0 = arith.constant 0 : i32
    return %arg0, %c0_i32 : i32, i32
  }
}

</mosaic_0001>

<llo_original>
// kernel: _forward.1
$region0: #{_forward.1}
  #allocation0 [shape = 'u32[]', space=smem, size = 0x4, offset = 0x4, fixed_abs, tag = 'smem constant byte address 0x4 - core index']
  #allocation1 [shape = 'u32[144,128]{1,0:T(1,128)}', space=vmem, size = 0x12000, scoped, tag = 'internal scratch']
  %s0 = inlined_call_operand.vmem [shape: f32[16,784], index: 0, kind: input, shape index: {}]
  %s1 = inlined_call_operand.hbm [shape: bf16[784,512], index: 1, kind: input, shape index: {}]
  %s2 = inlined_call_operand.vmem [shape: f32[1,512], index: 2, kind: input, shape index: {}]
  %s3 = inlined_call_operand.hbm [shape: bf16[512,512], index: 3, kind: input, shape index: {}]
  %s4 = inlined_call_operand.vmem [shape: f32[1,512], index: 4, kind: input, shape index: {}]
  %s5 = inlined_call_operand.hbm [shape: bf16[512,128], index: 5, kind: input, shape index: {}]
  %s6 = inlined_call_operand.vmem [shape: f32[1,128], index: 6, kind: input, shape index: {}]
  %s7 = inlined_call_operand.vmem [shape: bf16[16,128], index: 7, kind: output, shape index: {}]
  %s8 = sld [smem:[#allocation0]]
  $region50: #{_forward.1} parent=0
    _
  %s10 = ssub.s32 1, %s8
  %s11 = scalar_select 0, %s10, %s8
  $region1: #{_forward.1} parent=0
    #allocation2 [shape = 'u8[802816]{0}', space=vmem, size = 0xc4000, scoped, tag = 'input window, operand 1, single buffered']
    #allocation3 [shape = 's32[1]{0}', space=sflag, size = 0x4, scoped, tag = 'scoped memory for _forward.1']
    #allocation4 [shape = 'u8[524288]{0}', space=vmem, size = 0x80000, scoped, tag = 'input window, operand 3, single buffered']
    #allocation5 [shape = 's32[1]{0}', space=sflag, size = 0x4, scoped, tag = 'scoped memory for _forward.1']
    #allocation6 [shape = 'u8[131072]{0}', space=vmem, size = 0x20000, scoped, tag = 'input window, operand 5, single buffered']
    %12 = vsyncpa [#allocation3], 0
    %13 = vsyncpa [#allocation5], 0
    // Predicated region
    $region2: #{_forward.1} parent=1 // pred_check
      _
    $region3: #{_forward.1} parent=1 // pred_check_branch
      %15 = sbr.rel (0) target = $region5
    $region4: #{_forward.1} parent=1 // pred_region
      _
    $region5: #{_forward.1} parent=1 // pred_fallthru
      _
    // Predicated region
    $region6: #{_forward.1} parent=1 // pred_check
      _
    $region7: #{_forward.1} parent=1 // pred_check_branch
      %17 = sbr.rel (0) target = $region9
    $region8: #{_forward.1} parent=1 // pred_region
      %s19 = ssub.s32 25088, 25088
      %20 = vsyncadd [#allocation3], %s19
      %s21 = sshll.u32 [#allocation2], 4
      %s22 = int_to_ptr.vmem [resolvable:$true] %s21
      %27 = dma.hbm_to_vmem [thread:$0]  %s1, 25088, %s22, [#allocation3], 256, 256, 16
    $region9: #{_forward.1} parent=1 // pred_fallthru
      _
    // Predicated region
    $region10: #{_forward.1} parent=1 // pred_check
      _
    $region11: #{_forward.1} parent=1 // pred_check_branch
      %29 = sbr.rel (0) target = $region13
    $region12: #{_forward.1} parent=1 // pred_region
      _
    $region13: #{_forward.1} parent=1 // pred_fallthru
      _
    // Predicated region
    $region14: #{_forward.1} parent=1 // pred_check
      _
    $region15: #{_forward.1} parent=1 // pred_check_branch
      %31 = sbr.rel (0) target = $region17
    $region16: #{_forward.1} parent=1 // pred_region
      %s33 = ssub.s32 16384, 16384
      %34 = vsyncadd [#allocation5], %s33
      %s35 = sshll.u32 [#allocation4], 4
      %s36 = int_to_ptr.vmem [resolvable:$true] %s35
      %41 = dma.hbm_to_vmem [thread:$0]  %s3, 16384, %s36, [#allocation5], 256, 256, 16
    $region17: #{_forward.1} parent=1 // pred_fallthru
      _
    // Predicated region
    $region18: #{_forward.1} parent=1 // pred_check
      _
    $region19: #{_forward.1} parent=1 // pred_check_branch
      %43 = sbr.rel (0) target = $region21
    $region20: #{_forward.1} parent=1 // pred_region
      _
    $region21: #{_forward.1} parent=1 // pred_fallthru
      _
    // Predicated region
    $region22: #{_forward.1} parent=1 // pred_check
      _
    $region23: #{_forward.1} parent=1 // pred_check_branch
      %45 = sbr.rel (0) target = $region25
    $region24: #{_forward.1} parent=1 // pred_region
      %s47 = ssub.s32 4096, 4096
      %48 = vsyncadd [#allocation5], %s47
      %s49 = sshll.u32 [#allocation6], 4
      %s50 = int_to_ptr.vmem [resolvable:$true] %s49
      %55 = dma.hbm_to_vmem [thread:$0]  %s5, 4096, %s50, [#allocation5], 64, 64, 4
    $region25: #{_forward.1} parent=1 // pred_fallthru
      _
    // Predicated region
    $region26: #{_forward.1} parent=1 // pred_check
      _
    $region27: #{_forward.1} parent=1 // pred_check_branch
      %57 = sbr.rel (0) target = $region29
    $region28: #{_forward.1} parent=1 // pred_region
      _
    $region29: #{_forward.1} parent=1 // pred_fallthru
      _
    // Predicated region
    $region30: #{_forward.1} parent=1 // pred_check
      _
    $region31: #{_forward.1} parent=1 // pred_check_branch
      %59 = sbr.rel (0) target = $region33
    $region32: #{_forward.1} parent=1 // pred_region
      %60 = dma.done [#allocation3], 25088
    $region33: #{_forward.1} parent=1 // pred_fallthru
      _
    // Predicated region
    $region34: #{_forward.1} parent=1 // pred_check
      _
    $region35: #{_forward.1} parent=1 // pred_check_branch
      %62 = sbr.rel (0) target = $region37
    $region36: #{_forward.1} parent=1 // pred_region
      %63 = dma.done [#allocation5], 16384
    $region37: #{_forward.1} parent=1 // pred_fallthru
      _
    // Predicated region
    $region38: #{_forward.1} parent=1 // pred_check
      _
    $region39: #{_forward.1} parent=1 // pred_check_branch
      %65 = sbr.rel (0) target = $region41
    $region40: #{_forward.1} parent=1 // pred_region
      %66 = dma.done [#allocation5], 4096
    $region41: #{_forward.1} parent=1 // pred_fallthru
      _
    %v68 = vld [vmem:[%s0] sm:$0xff]
    %v69 = vld [vmem:[%s0 + $0x8] sm:$0xff]
    %v70 = vld [vmem:[%s0 + $0x10] sm:$0xff]
    %v71 = vld [vmem:[%s0 + $0x18] sm:$0xff]
    %v72 = vld [vmem:[%s0 + $0x20] sm:$0xff]
    %v73 = vld [vmem:[%s0 + $0x28] sm:$0xff]
    %v74 = vld [vmem:[%s0 + $0x30] sm:$0xff]
    %v75 = vld [vmem:[%s0 + $0x38] sm:$0xff]
    %v76 = vld [vmem:[%s0 + $0x40] sm:$0xff]
    %v77 = vld [vmem:[%s0 + $0x48] sm:$0xff]
    %v78 = vld [vmem:[%s0 + $0x50] sm:$0xff]
    %v79 = vld [vmem:[%s0 + $0x58] sm:$0xff]
    %v80 = vld [vmem:[%s0 + $0x60] sm:$0xff]
    %v81 = vld [vmem:[%s0 + $0x68] sm:$0xff]
    %v82 = vpack.c.bf16 %v75, %v68
    %v83 = vpack.c.bf16 %v76, %v69
    %v84 = vpack.c.bf16 %v77, %v70
    %v85 = vpack.c.bf16 %v78, %v71
    %v86 = vpack.c.bf16 %v79, %v72
    %v87 = vpack.c.bf16 %v80, %v73
    %v88 = vpack.c.bf16 %v81, %v74
    %v89 = vld [vmem:[#allocation2] sm:$0xff]
    %v90 = vld [vmem:[#allocation2 + $0x8] sm:$0xff]
    %v91 = vld [vmem:[#allocation2 + $0x10] sm:$0xff]
    %v92 = vld [vmem:[#allocation2 + $0x18] sm:$0xff]
    %v93 = vld [vmem:[#allocation2 + $0x20] sm:$0xff]
    %v94 = vld [vmem:[#allocation2 + $0x28] sm:$0xff]
    %v95 = vld [vmem:[#allocation2 + $0x30] sm:$0xff]
    %v96 = vld [vmem:[#allocation2 + $0x38] sm:$0xff]
    %v97 = vld [vmem:[#allocation2 + $0x40] sm:$0xff]
    %v98 = vld [vmem:[#allocation2 + $0x48] sm:$0xff]
    %v99 = vld [vmem:[#allocation2 + $0x50] sm:$0xff]
    %v100 = vld [vmem:[#allocation2 + $0x58] sm:$0xff]
    %v101 = vld [vmem:[#allocation2 + $0x60] sm:$0xff]
    %v102 = vld [vmem:[#allocation2 + $0x68] sm:$0xff]
    %v103 = vld [vmem:[#allocation2 + $0x70] sm:$0xff]
    %v104 = vld [vmem:[#allocation2 + $0x78] sm:$0xff]
    %v105 = vld [vmem:[#allocation2 + $0x80] sm:$0xff]
    %v106 = vld [vmem:[#allocation2 + $0x88] sm:$0xff]
    %v107 = vld [vmem:[#allocation2 + $0x90] sm:$0xff]
    %v108 = vld [vmem:[#allocation2 + $0x98] sm:$0xff]
    %v109 = vld [vmem:[#allocation2 + $0xa0] sm:$0xff]
    %v110 = vld [vmem:[#allocation2 + $0xa8] sm:$0xff]
    %v111 = vld [vmem:[#allocation2 + $0xb0] sm:$0xff]
    %v112 = vld [vmem:[#allocation2 + $0xb8] sm:$0xff]
    %v113 = vld [vmem:[#allocation2 + $0xc0] sm:$0xff]
    %v114 = vld [vmem:[#allocation2 + $0xc8] sm:$0xff]
    %v115 = vld [vmem:[#allocation2 + $0xd0] sm:$0xff]
    %v116 = vld [vmem:[#allocation2 + $0xd8] sm:$0xff]
    %v117 = vld [vmem:[#allocation2 + $0xe0] sm:$0xff]
    %v118 = vld [vmem:[#allocation2 + $0xe8] sm:$0xff]
    %v119 = vld [vmem:[#allocation2 + $0xf0] sm:$0xff]
    %v120 = vld [vmem:[#allocation2 + $0xf8] sm:$0xff]
    %v121 = vld [vmem:[#allocation2 + $0x100] sm:$0xff]
    %v122 = vld [vmem:[#allocation2 + $0x108] sm:$0xff]
    %v123 = vld [vmem:[#allocation2 + $0x110] sm:$0xff]
    %v124 = vld [vmem:[#allocation2 + $0x118] sm:$0xff]
    %v125 = vld [vmem:[#allocation2 + $0x120] sm:$0xff]
    %v126 = vld [vmem:[#allocation2 + $0x128] sm:$0xff]
    %v127 = vld [vmem:[#allocation2 + $0x130] sm:$0xff]
    %v128 = vld [vmem:[#allocation2 + $0x138] sm:$0xff]
    %v129 = vld [vmem:[#allocation2 + $0x140] sm:$0xff]
    %v130 = vld [vmem:[#allocation2 + $0x148] sm:$0xff]
    %v131 = vld [vmem:[#allocation2 + $0x150] sm:$0xff]
    %v132 = vld [vmem:[#allocation2 + $0x158] sm:$0xff]
    %v133 = vld [vmem:[#allocation2 + $0x160] sm:$0xff]
    %v134 = vld [vmem:[#allocation2 + $0x168] sm:$0xff]
    %v135 = vld [vmem:[#allocation2 + $0x170] sm:$0xff]
    %v136 = vld [vmem:[#allocation2 + $0x178] sm:$0xff]
    %v137 = vld [vmem:[#allocation2 + $0x180] sm:$0xff]
    %v138 = vld [vmem:[#allocation2 + $0x188] sm:$0xff]
    %v139 = vld [vmem:[#allocation2 + $0x190] sm:$0xff]
    %v140 = vld [vmem:[#allocation2 + $0x198] sm:$0xff]
    %v141 = vld [vmem:[#allocation2 + $0x1a0] sm:$0xff]
    %v142 = vld [vmem:[#allocation2 + $0x1a8] sm:$0xff]
    %v143 = vld [vmem:[#allocation2 + $0x1b0] sm:$0xff]
    %v144 = vld [vmem:[#allocation2 + $0x1b8] sm:$0xff]
    %v145 = vld [vmem:[#allocation2 + $0x1c0] sm:$0xff]
    %v146 = vld [vmem:[#allocation2 + $0x1c8] sm:$0xff]
    %v147 = vld [vmem:[#allocation2 + $0x1d0] sm:$0xff]
    %v148 = vld [vmem:[#allocation2 + $0x1d8] sm:$0xff]
    %v149 = vld [vmem:[#allocation2 + $0x1e0] sm:$0xff]
    %v150 = vld [vmem:[#allocation2 + $0x1e8] sm:$0xff]
    %v151 = vld [vmem:[#allocation2 + $0x1f0] sm:$0xff]
    %v152 = vld [vmem:[#allocation2 + $0x1f8] sm:$0xff]
    %v153 = vld [vmem:[#allocation2 + $0x200] sm:$0xff]
    %v154 = vld [vmem:[#allocation2 + $0x208] sm:$0xff]
    %v155 = vld [vmem:[#allocation2 + $0x210] sm:$0xff]
    %v156 = vld [vmem:[#allocation2 + $0x218] sm:$0xff]
    %v157 = vld [vmem:[#allocation2 + $0x220] sm:$0xff]
    %v158 = vld [vmem:[#allocation2 + $0x228] sm:$0xff]
    %v159 = vld [vmem:[#allocation2 + $0x230] sm:$0xff]
    %v160 = vld [vmem:[#allocation2 + $0x238] sm:$0xff]
    %v161 = vld [vmem:[#allocation2 + $0x240] sm:$0xff]
    %v162 = vld [vmem:[#allocation2 + $0x248] sm:$0xff]
    %v163 = vld [vmem:[#allocation2 + $0x250] sm:$0xff]
    %v164 = vld [vmem:[#allocation2 + $0x258] sm:$0xff]
    %v165 = vld [vmem:[#allocation2 + $0x260] sm:$0xff]
    %v166 = vld [vmem:[#allocation2 + $0x268] sm:$0xff]
    %v167 = vld [vmem:[#allocation2 + $0x270] sm:$0xff]
    %v168 = vld [vmem:[#allocation2 + $0x278] sm:$0xff]
    %v169 = vld [vmem:[#allocation2 + $0x280] sm:$0xff]
    %v170 = vld [vmem:[#allocation2 + $0x288] sm:$0xff]
    %v171 = vld [vmem:[#allocation2 + $0x290] sm:$0xff]
    %v172 = vld [vmem:[#allocation2 + $0x298] sm:$0xff]
    %v173 = vld [vmem:[#allocation2 + $0x2a0] sm:$0xff]
    %v174 = vld [vmem:[#allocation2 + $0x2a8] sm:$0xff]
    %v175 = vld [vmem:[#allocation2 + $0x2b0] sm:$0xff]
    %v176 = vld [vmem:[#allocation2 + $0x2b8] sm:$0xff]
    %v177 = vld [vmem:[#allocation2 + $0x2c0] sm:$0xff]
    %v178 = vld [vmem:[#allocation2 + $0x2c8] sm:$0xff]
    %v179 = vld [vmem:[#allocation2 + $0x2d0] sm:$0xff]
    %v180 = vld [vmem:[#allocation2 + $0x2d8] sm:$0xff]
    %v181 = vld [vmem:[#allocation2 + $0x2e0] sm:$0xff]
    %v182 = vld [vmem:[#allocation2 + $0x2e8] sm:$0xff]
    %v183 = vld [vmem:[#allocation2 + $0x2f0] sm:$0xff]
    %v184 = vld [vmem:[#allocation2 + $0x2f8] sm:$0xff]
    %v185 = vld [vmem:[#allocation2 + $0x300] sm:$0xff]
    %v186 = vld [vmem:[#allocation2 + $0x308] sm:$0xff]
    %v187 = vld [vmem:[#allocation2 + $0x310] sm:$0xff]
    %v188 = vld [vmem:[#allocation2 + $0x318] sm:$0xff]
    %v189 = vld [vmem:[#allocation2 + $0x320] sm:$0xff]
    %v190 = vld [vmem:[#allocation2 + $0x328] sm:$0xff]
    %v191 = vld [vmem:[#allocation2 + $0x330] sm:$0xff]
    %v192 = vld [vmem:[#allocation2 + $0x338] sm:$0xff]
    %v193 = vld [vmem:[#allocation2 + $0x340] sm:$0xff]
    %v194 = vld [vmem:[#allocation2 + $0x348] sm:$0xff]
    %v195 = vld [vmem:[#allocation2 + $0x350] sm:$0xff]
    %v196 = vld [vmem:[#allocation2 + $0x358] sm:$0xff]
    %v197 = vld [vmem:[#allocation2 + $0x360] sm:$0xff]
    %v198 = vld [vmem:[#allocation2 + $0x368] sm:$0xff]
    %v199 = vld [vmem:[#allocation2 + $0x370] sm:$0xff]
    %v200 = vld [vmem:[#allocation2 + $0x378] sm:$0xff]
    %v201 = vld [vmem:[#allocation2 + $0x380] sm:$0xff]
    %v202 = vld [vmem:[#allocation2 + $0x388] sm:$0xff]
    %v203 = vld [vmem:[#allocation2 + $0x390] sm:$0xff]
    %v204 = vld [vmem:[#allocation2 + $0x398] sm:$0xff]
    %v205 = vld [vmem:[#allocation2 + $0x3a0] sm:$0xff]
    %v206 = vld [vmem:[#allocation2 + $0x3a8] sm:$0xff]
    %v207 = vld [vmem:[#allocation2 + $0x3b0] sm:$0xff]
    %v208 = vld [vmem:[#allocation2 + $0x3b8] sm:$0xff]
    %v209 = vld [vmem:[#allocation2 + $0x3c0] sm:$0xff]
    %v210 = vld [vmem:[#allocation2 + $0x3c8] sm:$0xff]
    %v211 = vld [vmem:[#allocation2 + $0x3d0] sm:$0xff]
    %v212 = vld [vmem:[#allocation2 + $0x3d8] sm:$0xff]
    %v213 = vld [vmem:[#allocation2 + $0x3e0] sm:$0xff]
    %v214 = vld [vmem:[#allocation2 + $0x3e8] sm:$0xff]
    %v215 = vld [vmem:[#allocation2 + $0x3f0] sm:$0xff]
    %v216 = vld [vmem:[#allocation2 + $0x3f8] sm:$0xff]
    %v217 = vld [vmem:[#allocation2 + $0x400] sm:$0xff]
    %v218 = vld [vmem:[#allocation2 + $0x408] sm:$0xff]
    %v219 = vld [vmem:[#allocation2 + $0x410] sm:$0xff]
    %v220 = vld [vmem:[#allocation2 + $0x418] sm:$0xff]
    %v221 = vld [vmem:[#allocation2 + $0x420] sm:$0xff]
    %v222 = vld [vmem:[#allocation2 + $0x428] sm:$0xff]
    %v223 = vld [vmem:[#allocation2 + $0x430] sm:$0xff]
    %v224 = vld [vmem:[#allocation2 + $0x438] sm:$0xff]
    %v225 = vld [vmem:[#allocation2 + $0x440] sm:$0xff]
    %v226 = vld [vmem:[#allocation2 + $0x448] sm:$0xff]
    %v227 = vld [vmem:[#allocation2 + $0x450] sm:$0xff]
    %v228 = vld [vmem:[#allocation2 + $0x458] sm:$0xff]
    %v229 = vld [vmem:[#allocation2 + $0x460] sm:$0xff]
    %v230 = vld [vmem:[#allocation2 + $0x468] sm:$0xff]
    %v231 = vld [vmem:[#allocation2 + $0x470] sm:$0xff]
    %v232 = vld [vmem:[#allocation2 + $0x478] sm:$0xff]
    %v233 = vld [vmem:[#allocation2 + $0x480] sm:$0xff]
    %v234 = vld [vmem:[#allocation2 + $0x488] sm:$0xff]
    %v235 = vld [vmem:[#allocation2 + $0x490] sm:$0xff]
    %v236 = vld [vmem:[#allocation2 + $0x498] sm:$0xff]
    %v237 = vld [vmem:[#allocation2 + $0x4a0] sm:$0xff]
    %v238 = vld [vmem:[#allocation2 + $0x4a8] sm:$0xff]
    %v239 = vld [vmem:[#allocation2 + $0x4b0] sm:$0xff]
    %v240 = vld [vmem:[#allocation2 + $0x4b8] sm:$0xff]
    %v241 = vld [vmem:[#allocation2 + $0x4c0] sm:$0xff]
    %v242 = vld [vmem:[#allocation2 + $0x4c8] sm:$0xff]
    %v243 = vld [vmem:[#allocation2 + $0x4d0] sm:$0xff]
    %v244 = vld [vmem:[#allocation2 + $0x4d8] sm:$0xff]
    %v245 = vld [vmem:[#allocation2 + $0x4e0] sm:$0xff]
    %v246 = vld [vmem:[#allocation2 + $0x4e8] sm:$0xff]
    %v247 = vld [vmem:[#allocation2 + $0x4f0] sm:$0xff]
    %v248 = vld [vmem:[#allocation2 + $0x4f8] sm:$0xff]
    %v249 = vld [vmem:[#allocation2 + $0x500] sm:$0xff]
    %v250 = vld [vmem:[#allocation2 + $0x508] sm:$0xff]
    %v251 = vld [vmem:[#allocation2 + $0x510] sm:$0xff]
    %v252 = vld [vmem:[#allocation2 + $0x518] sm:$0xff]
    %v253 = vld [vmem:[#allocation2 + $0x520] sm:$0xff]
    %v254 = vld [vmem:[#allocation2 + $0x528] sm:$0xff]
    %v255 = vld [vmem:[#allocation2 + $0x530] sm:$0xff]
    %v256 = vld [vmem:[#allocation2 + $0x538] sm:$0xff]
    %v257 = vld [vmem:[#allocation2 + $0x540] sm:$0xff]
    %v258 = vld [vmem:[#allocation2 + $0x548] sm:$0xff]
    %v259 = vld [vmem:[#allocation2 + $0x550] sm:$0xff]
    %v260 = vld [vmem:[#allocation2 + $0x558] sm:$0xff]
    %v261 = vld [vmem:[#allocation2 + $0x560] sm:$0xff]
    %v262 = vld [vmem:[#allocation2 + $0x568] sm:$0xff]
    %v263 = vld [vmem:[#allocation2 + $0x570] sm:$0xff]
    %v264 = vld [vmem:[#allocation2 + $0x578] sm:$0xff]
    %v265 = vld [vmem:[#allocation2 + $0x580] sm:$0xff]
    %v266 = vld [vmem:[#allocation2 + $0x588] sm:$0xff]
    %v267 = vld [vmem:[#allocation2 + $0x590] sm:$0xff]
    %v268 = vld [vmem:[#allocation2 + $0x598] sm:$0xff]
    %v269 = vld [vmem:[#allocation2 + $0x5a0] sm:$0xff]
    %v270 = vld [vmem:[#allocation2 + $0x5a8] sm:$0xff]
    %v271 = vld [vmem:[#allocation2 + $0x5b0] sm:$0xff]
    %v272 = vld [vmem:[#allocation2 + $0x5b8] sm:$0xff]
    %v273 = vld [vmem:[#allocation2 + $0x5c0] sm:$0xff]
    %v274 = vld [vmem:[#allocation2 + $0x5c8] sm:$0xff]
    %v275 = vld [vmem:[#allocation2 + $0x5d0] sm:$0xff]
    %v276 = vld [vmem:[#allocation2 + $0x5d8] sm:$0xff]
    %v277 = vld [vmem:[#allocation2 + $0x5e0] sm:$0xff]
    %v278 = vld [vmem:[#allocation2 + $0x5e8] sm:$0xff]
    %v279 = vld [vmem:[#allocation2 + $0x5f0] sm:$0xff]
    %v280 = vld [vmem:[#allocation2 + $0x5f8] sm:$0xff]
    %v281 = vld [vmem:[#allocation2 + $0x600] sm:$0xff]
    %v282 = vld [vmem:[#allocation2 + $0x608] sm:$0xff]
    %v283 = vld [vmem:[#allocation2 + $0x610] sm:$0xff]
    %v284 = vld [vmem:[#allocation2 + $0x618] sm:$0xff]
    %v285 = vld [vmem:[%s2] sm:$0xf]
    %v287 = vlaneseq
    %v288 = vshrl.u32 %v287, 7
    %v289 = vsub.s32 0, %v288
    %v290 = vrot.slane %v285, %v289
    %v291 = vlaneseq
    %v292 = vshrl.u32 %v291, 7
    %v293 = vsub.s32 1, %v292
    %v294 = vrot.slane %v285, %v293
    %v295 = vlaneseq
    %v296 = vshrl.u32 %v295, 7
    %v297 = vsub.s32 2, %v296
    %v298 = vrot.slane %v285, %v297
    %v299 = vlaneseq
    %v300 = vshrl.u32 %v299, 7
    %v301 = vsub.s32 3, %v300
    %v302 = vrot.slane %v285, %v301
    %v503 = vunpack.c.l.b16 %v89
    %v504 = vunpack.c.h.b16 %v89
    %v505 = vunpack.c.l.b16 %v90
    %v506 = vunpack.c.h.b16 %v90
    %v507 = vunpack.c.l.b16 %v91
    %v508 = vunpack.c.h.b16 %v91
    %v509 = vunpack.c.l.b16 %v92
    %v510 = vunpack.c.h.b16 %v92
    %v511 = vunpack.c.l.b16 %v93
    %v512 = vunpack.c.h.b16 %v93
    %v513 = vunpack.c.l.b16 %v94
    %v514 = vunpack.c.h.b16 %v94
    %v515 = vunpack.c.l.b16 %v95
    %v516 = vunpack.c.h.b16 %v95
    %v517 = vunpack.c.l.b16 %v96
    %v518 = vunpack.c.h.b16 %v96
    %v519 = vunpack.c.l.b16 %v97
    %v520 = vunpack.c.h.b16 %v97
    %v521 = vunpack.c.l.b16 %v98
    %v522 = vunpack.c.h.b16 %v98
    %v523 = vunpack.c.l.b16 %v99
    %v524 = vunpack.c.h.b16 %v99
    %v525 = vunpack.c.l.b16 %v100
    %v526 = vunpack.c.h.b16 %v100
    %v527 = vunpack.c.l.b16 %v101
    %v528 = vunpack.c.h.b16 %v101
    %v529 = vunpack.c.l.b16 %v102
    %v530 = vunpack.c.h.b16 %v102
    %v531 = vunpack.c.l.b16 %v103
    %v532 = vunpack.c.h.b16 %v103
    %v533 = vunpack.c.l.b16 %v104
    %v534 = vunpack.c.h.b16 %v104
    %v535 = vunpack.c.l.b16 %v105
    %v536 = vunpack.c.h.b16 %v105
    %v537 = vunpack.c.l.b16 %v106
    %v538 = vunpack.c.h.b16 %v106
    %v539 = vunpack.c.l.b16 %v107
    %v540 = vunpack.c.h.b16 %v107
    %v541 = vunpack.c.l.b16 %v108
    %v542 = vunpack.c.h.b16 %v108
    %v543 = vunpack.c.l.b16 %v109
    %v544 = vunpack.c.h.b16 %v109
    %v545 = vunpack.c.l.b16 %v110
    %v546 = vunpack.c.h.b16 %v110
    %v547 = vunpack.c.l.b16 %v111
    %v548 = vunpack.c.h.b16 %v111
    %v549 = vunpack.c.l.b16 %v112
    %v550 = vunpack.c.h.b16 %v112
    %v551 = vunpack.c.l.b16 %v113
    %v552 = vunpack.c.h.b16 %v113
    %v553 = vunpack.c.l.b16 %v114
    %v554 = vunpack.c.h.b16 %v114
    %v555 = vunpack.c.l.b16 %v115
    %v556 = vunpack.c.h.b16 %v115
    %v557 = vunpack.c.l.b16 %v116
    %v558 = vunpack.c.h.b16 %v116
    %v559 = vunpack.c.l.b16 %v117
    %v560 = vunpack.c.h.b16 %v117
    %v561 = vunpack.c.l.b16 %v118
    %v562 = vunpack.c.h.b16 %v118
    %v563 = vunpack.c.l.b16 %v119
    %v564 = vunpack.c.h.b16 %v119
    %v565 = vunpack.c.l.b16 %v120
    %v566 = vunpack.c.h.b16 %v120
    %v567 = vunpack.c.l.b16 %v121
    %v568 = vunpack.c.h.b16 %v121
    %v569 = vunpack.c.l.b16 %v122
    %v570 = vunpack.c.h.b16 %v122
    %v571 = vunpack.c.l.b16 %v123
    %v572 = vunpack.c.h.b16 %v123
    %v573 = vunpack.c.l.b16 %v124
    %v574 = vunpack.c.h.b16 %v124
    %v575 = vunpack.c.l.b16 %v125
    %v576 = vunpack.c.h.b16 %v125
    %v577 = vunpack.c.l.b16 %v126
    %v578 = vunpack.c.h.b16 %v126
    %v579 = vunpack.c.l.b16 %v127
    %v580 = vunpack.c.h.b16 %v127
    %v581 = vunpack.c.l.b16 %v128
    %v582 = vunpack.c.h.b16 %v128
    %v583 = vunpack.c.l.b16 %v129
    %v584 = vunpack.c.h.b16 %v129
    %v585 = vunpack.c.l.b16 %v130
    %v586 = vunpack.c.h.b16 %v130
    %v587 = vunpack.c.l.b16 %v131
    %v588 = vunpack.c.h.b16 %v131
    %v589 = vunpack.c.l.b16 %v132
    %v590 = vunpack.c.h.b16 %v132
    %v591 = vunpack.c.l.b16 %v133
    %v592 = vunpack.c.h.b16 %v133
    %v593 = vunpack.c.l.b16 %v134
    %v594 = vunpack.c.h.b16 %v134
    %v595 = vunpack.c.l.b16 %v135
    %v596 = vunpack.c.h.b16 %v135
    %v597 = vunpack.c.l.b16 %v136
    %v598 = vunpack.c.h.b16 %v136
    %v599 = vunpack.c.l.b16 %v137
    %v600 = vunpack.c.h.b16 %v137
    %v601 = vunpack.c.l.b16 %v138
    %v602 = vunpack.c.h.b16 %v138
    %v603 = vunpack.c.l.b16 %v139
    %v604 = vunpack.c.h.b16 %v139
    %v605 = vunpack.c.l.b16 %v140
    %v606 = vunpack.c.h.b16 %v140
    %v607 = vunpack.c.l.b16 %v141
    %v608 = vunpack.c.h.b16 %v141
    %v609 = vunpack.c.l.b16 %v142
    %v610 = vunpack.c.h.b16 %v142
    %v611 = vunpack.c.l.b16 %v143
    %v612 = vunpack.c.h.b16 %v143
    %v613 = vunpack.c.l.b16 %v144
    %v614 = vunpack.c.h.b16 %v144
    %v615 = vunpack.c.l.b16 %v145
    %v616 = vunpack.c.h.b16 %v145
    %v617 = vunpack.c.l.b16 %v146
    %v618 = vunpack.c.h.b16 %v146
    %v619 = vunpack.c.l.b16 %v147
    %v620 = vunpack.c.h.b16 %v147
    %v621 = vunpack.c.l.b16 %v148
    %v622 = vunpack.c.h.b16 %v148
    %v623 = vunpack.c.l.b16 %v149
    %v624 = vunpack.c.h.b16 %v149
    %v625 = vunpack.c.l.b16 %v150
    %v626 = vunpack.c.h.b16 %v150
    %v627 = vunpack.c.l.b16 %v151
    %v628 = vunpack.c.h.b16 %v151
    %v629 = vunpack.c.l.b16 %v152
    %v630 = vunpack.c.h.b16 %v152
    %v631 = vunpack.c.l.b16 %v153
    %v632 = vunpack.c.h.b16 %v153
    %v633 = vunpack.c.l.b16 %v154
    %v634 = vunpack.c.h.b16 %v154
    %v635 = vunpack.c.l.b16 %v155
    %v636 = vunpack.c.h.b16 %v155
    %v637 = vunpack.c.l.b16 %v156
    %v638 = vunpack.c.h.b16 %v156
    %v639 = vunpack.c.l.b16 %v157
    %v640 = vunpack.c.h.b16 %v157
    %v641 = vunpack.c.l.b16 %v158
    %v642 = vunpack.c.h.b16 %v158
    %v643 = vunpack.c.l.b16 %v159
    %v644 = vunpack.c.h.b16 %v159
    %v645 = vunpack.c.l.b16 %v160
    %v646 = vunpack.c.h.b16 %v160
    %v647 = vunpack.c.l.b16 %v161
    %v648 = vunpack.c.h.b16 %v161
    %v649 = vunpack.c.l.b16 %v162
    %v650 = vunpack.c.h.b16 %v162
    %v651 = vunpack.c.l.b16 %v163
    %v652 = vunpack.c.h.b16 %v163
    %v653 = vunpack.c.l.b16 %v164
    %v654 = vunpack.c.h.b16 %v164
    %v655 = vunpack.c.l.b16 %v165
    %v656 = vunpack.c.h.b16 %v165
    %v657 = vunpack.c.l.b16 %v166
    %v658 = vunpack.c.h.b16 %v166
    %v659 = vunpack.c.l.b16 %v167
    %v660 = vunpack.c.h.b16 %v167
    %v661 = vunpack.c.l.b16 %v168
    %v662 = vunpack.c.h.b16 %v168
    %v663 = vunpack.c.l.b16 %v169
    %v664 = vunpack.c.h.b16 %v169
    %v665 = vunpack.c.l.b16 %v170
    %v666 = vunpack.c.h.b16 %v170
    %v667 = vunpack.c.l.b16 %v171
    %v668 = vunpack.c.h.b16 %v171
    %v669 = vunpack.c.l.b16 %v172
    %v670 = vunpack.c.h.b16 %v172
    %v671 = vunpack.c.l.b16 %v173
    %v672 = vunpack.c.h.b16 %v173
    %v673 = vunpack.c.l.b16 %v174
    %v674 = vunpack.c.h.b16 %v174
    %v675 = vunpack.c.l.b16 %v175
    %v676 = vunpack.c.h.b16 %v175
    %v677 = vunpack.c.l.b16 %v176
    %v678 = vunpack.c.h.b16 %v176
    %v679 = vunpack.c.l.b16 %v177
    %v680 = vunpack.c.h.b16 %v177
    %v681 = vunpack.c.l.b16 %v178
    %v682 = vunpack.c.h.b16 %v178
    %v683 = vunpack.c.l.b16 %v179
    %v684 = vunpack.c.h.b16 %v179
    %v685 = vunpack.c.l.b16 %v180
    %v686 = vunpack.c.h.b16 %v180
    %v687 = vunpack.c.l.b16 %v181
    %v688 = vunpack.c.h.b16 %v181
    %v689 = vunpack.c.l.b16 %v182
    %v690 = vunpack.c.h.b16 %v182
    %v691 = vunpack.c.l.b16 %v183
    %v692 = vunpack.c.h.b16 %v183
    %v693 = vunpack.c.l.b16 %v184
    %v694 = vunpack.c.h.b16 %v184
    %v695 = vunpack.c.l.b16 %v185
    %v696 = vunpack.c.h.b16 %v185
    %v697 = vunpack.c.l.b16 %v186
    %v698 = vunpack.c.h.b16 %v186
    %v699 = vunpack.c.l.b16 %v187
    %v700 = vunpack.c.h.b16 %v187
    %v701 = vunpack.c.l.b16 %v188
    %v702 = vunpack.c.h.b16 %v188
    %v703 = vunpack.c.l.b16 %v189
    %v704 = vunpack.c.h.b16 %v189
    %v705 = vunpack.c.l.b16 %v190
    %v706 = vunpack.c.h.b16 %v190
    %v707 = vunpack.c.l.b16 %v191
    %v708 = vunpack.c.h.b16 %v191
    %v709 = vunpack.c.l.b16 %v192
    %v710 = vunpack.c.h.b16 %v192
    %v711 = vunpack.c.l.b16 %v193
    %v712 = vunpack.c.h.b16 %v193
    %v713 = vunpack.c.l.b16 %v194
    %v714 = vunpack.c.h.b16 %v194
    %v715 = vunpack.c.l.b16 %v195
    %v716 = vunpack.c.h.b16 %v195
    %v717 = vunpack.c.l.b16 %v196
    %v718 = vunpack.c.h.b16 %v196
    %v719 = vunpack.c.l.b16 %v197
    %v720 = vunpack.c.h.b16 %v197
    %v721 = vunpack.c.l.b16 %v198
    %v722 = vunpack.c.h.b16 %v198
    %v723 = vunpack.c.l.b16 %v199
    %v724 = vunpack.c.h.b16 %v199
    %v725 = vunpack.c.l.b16 %v200
    %v726 = vunpack.c.h.b16 %v200
    %v727 = vunpack.c.l.b16 %v201
    %v728 = vunpack.c.h.b16 %v201
    %v729 = vunpack.c.l.b16 %v202
    %v730 = vunpack.c.h.b16 %v202
    %v731 = vunpack.c.l.b16 %v203
    %v732 = vunpack.c.h.b16 %v203
    %v733 = vunpack.c.l.b16 %v204
    %v734 = vunpack.c.h.b16 %v204
    %v735 = vunpack.c.l.b16 %v205
    %v736 = vunpack.c.h.b16 %v205
    %v737 = vunpack.c.l.b16 %v206
    %v738 = vunpack.c.h.b16 %v206
    %v739 = vunpack.c.l.b16 %v207
    %v740 = vunpack.c.h.b16 %v207
    %v741 = vunpack.c.l.b16 %v208
    %v742 = vunpack.c.h.b16 %v208
    %v743 = vunpack.c.l.b16 %v209
    %v744 = vunpack.c.h.b16 %v209
    %v745 = vunpack.c.l.b16 %v210
    %v746 = vunpack.c.h.b16 %v210
    %v747 = vunpack.c.l.b16 %v211
    %v748 = vunpack.c.h.b16 %v211
    %v749 = vunpack.c.l.b16 %v212
    %v750 = vunpack.c.h.b16 %v212
    %v751 = vunpack.c.l.b16 %v213
    %v752 = vunpack.c.h.b16 %v213
    %v753 = vunpack.c.l.b16 %v214
    %v754 = vunpack.c.h.b16 %v214
    %v755 = vunpack.c.l.b16 %v215
    %v756 = vunpack.c.h.b16 %v215
    %v757 = vunpack.c.l.b16 %v216
    %v758 = vunpack.c.h.b16 %v216
    %v759 = vunpack.c.l.b16 %v217
    %v760 = vunpack.c.h.b16 %v217
    %v761 = vunpack.c.l.b16 %v218
    %v762 = vunpack.c.h.b16 %v218
    %v763 = vunpack.c.l.b16 %v219
    %v764 = vunpack.c.h.b16 %v219
    %v765 = vunpack.c.l.b16 %v220
    %v766 = vunpack.c.h.b16 %v220
    %v767 = vunpack.c.l.b16 %v221
    %v768 = vunpack.c.h.b16 %v221
    %v769 = vunpack.c.l.b16 %v222
    %v770 = vunpack.c.h.b16 %v222
    %v771 = vunpack.c.l.b16 %v223
    %v772 = vunpack.c.h.b16 %v223
    %v773 = vunpack.c.l.b16 %v224
    %v774 = vunpack.c.h.b16 %v224
    %v775 = vunpack.c.l.b16 %v225
    %v776 = vunpack.c.h.b16 %v225
    %v777 = vunpack.c.l.b16 %v226
    %v778 = vunpack.c.h.b16 %v226
    %v779 = vunpack.c.l.b16 %v227
    %v780 = vunpack.c.h.b16 %v227
    %v781 = vunpack.c.l.b16 %v228
    %v782 = vunpack.c.h.b16 %v228
    %v783 = vunpack.c.l.b16 %v229
    %v784 = vunpack.c.h.b16 %v229
    %v785 = vunpack.c.l.b16 %v230
    %v786 = vunpack.c.h.b16 %v230
    %v787 = vunpack.c.l.b16 %v231
    %v788 = vunpack.c.h.b16 %v231
    %v789 = vunpack.c.l.b16 %v232
    %v790 = vunpack.c.h.b16 %v232
    %v791 = vunpack.c.l.b16 %v233
    %v792 = vunpack.c.h.b16 %v233
    %v793 = vunpack.c.l.b16 %v234
    %v794 = vunpack.c.h.b16 %v234
    %v795 = vunpack.c.l.b16 %v235
    %v796 = vunpack.c.h.b16 %v235
    %v797 = vunpack.c.l.b16 %v236
    %v798 = vunpack.c.h.b16 %v236
    %v799 = vunpack.c.l.b16 %v237
    %v800 = vunpack.c.h.b16 %v237
    %v801 = vunpack.c.l.b16 %v238
    %v802 = vunpack.c.h.b16 %v238
    %v803 = vunpack.c.l.b16 %v239
    %v804 = vunpack.c.h.b16 %v239
    %v805 = vunpack.c.l.b16 %v240
    %v806 = vunpack.c.h.b16 %v240
    %v807 = vunpack.c.l.b16 %v241
    %v808 = vunpack.c.h.b16 %v241
    %v809 = vunpack.c.l.b16 %v242
    %v810 = vunpack.c.h.b16 %v242
    %v811 = vunpack.c.l.b16 %v243
    %v812 = vunpack.c.h.b16 %v243
    %v813 = vunpack.c.l.b16 %v244
    %v814 = vunpack.c.h.b16 %v244
    %v815 = vunpack.c.l.b16 %v245
    %v816 = vunpack.c.h.b16 %v245
    %v817 = vunpack.c.l.b16 %v246
    %v818 = vunpack.c.h.b16 %v246
    %v819 = vunpack.c.l.b16 %v247
    %v820 = vunpack.c.h.b16 %v247
    %v821 = vunpack.c.l.b16 %v248
    %v822 = vunpack.c.h.b16 %v248
    %v823 = vunpack.c.l.b16 %v249
    %v824 = vunpack.c.h.b16 %v249
    %v825 = vunpack.c.l.b16 %v250
    %v826 = vunpack.c.h.b16 %v250
    %v827 = vunpack.c.l.b16 %v251
    %v828 = vunpack.c.h.b16 %v251
    %v829 = vunpack.c.l.b16 %v252
    %v830 = vunpack.c.h.b16 %v252
    %v831 = vunpack.c.l.b16 %v253
    %v832 = vunpack.c.h.b16 %v253
    %v833 = vunpack.c.l.b16 %v254
    %v834 = vunpack.c.h.b16 %v254
    %v835 = vunpack.c.l.b16 %v255
    %v836 = vunpack.c.h.b16 %v255
    %v837 = vunpack.c.l.b16 %v256
    %v838 = vunpack.c.h.b16 %v256
    %v839 = vunpack.c.l.b16 %v257
    %v840 = vunpack.c.h.b16 %v257
    %v841 = vunpack.c.l.b16 %v258
    %v842 = vunpack.c.h.b16 %v258
    %v843 = vunpack.c.l.b16 %v259
    %v844 = vunpack.c.h.b16 %v259
    %v845 = vunpack.c.l.b16 %v260
    %v846 = vunpack.c.h.b16 %v260
    %v847 = vunpack.c.l.b16 %v261
    %v848 = vunpack.c.h.b16 %v261
    %v849 = vunpack.c.l.b16 %v262
    %v850 = vunpack.c.h.b16 %v262
    %v851 = vunpack.c.l.b16 %v263
    %v852 = vunpack.c.h.b16 %v263
    %v853 = vunpack.c.l.b16 %v264
    %v854 = vunpack.c.h.b16 %v264
    %v855 = vunpack.c.l.b16 %v265
    %v856 = vunpack.c.h.b16 %v265
    %v857 = vunpack.c.l.b16 %v266
    %v858 = vunpack.c.h.b16 %v266
    %v859 = vunpack.c.l.b16 %v267
    %v860 = vunpack.c.h.b16 %v267
    %v861 = vunpack.c.l.b16 %v268
    %v862 = vunpack.c.h.b16 %v268
    %v863 = vunpack.c.l.b16 %v269
    %v864 = vunpack.c.h.b16 %v269
    %v865 = vunpack.c.l.b16 %v270
    %v866 = vunpack.c.h.b16 %v270
    %v867 = vunpack.c.l.b16 %v271
    %v868 = vunpack.c.h.b16 %v271
    %v869 = vunpack.c.l.b16 %v272
    %v870 = vunpack.c.h.b16 %v272
    %v871 = vunpack.c.l.b16 %v273
    %v872 = vunpack.c.h.b16 %v273
    %v873 = vunpack.c.l.b16 %v274
    %v874 = vunpack.c.h.b16 %v274
    %v875 = vunpack.c.l.b16 %v275
    %v876 = vunpack.c.h.b16 %v275
    %v877 = vunpack.c.l.b16 %v276
    %v878 = vunpack.c.h.b16 %v276
    %v879 = vunpack.c.l.b16 %v277
    %v880 = vunpack.c.h.b16 %v277
    %v881 = vunpack.c.l.b16 %v278
    %v882 = vunpack.c.h.b16 %v278
    %v883 = vunpack.c.l.b16 %v279
    %v884 = vunpack.c.h.b16 %v279
    %v885 = vunpack.c.l.b16 %v280
    %v886 = vunpack.c.h.b16 %v280
    %v887 = vunpack.c.l.b16 %v281
    %v888 = vunpack.c.h.b16 %v281
    %v889 = vunpack.c.l.b16 %v282
    %v890 = vunpack.c.h.b16 %v282
    %v891 = vunpack.c.l.b16 %v283
    %v892 = vunpack.c.h.b16 %v283
    %v893 = vunpack.c.l.b16 %v284
    %v894 = vunpack.c.h.b16 %v284
    %v895 = vpack.c.b16 %v507, %v503
    %v896 = vpack.c.b16 %v508, %v504
    %v897 = vpack.c.b16 %v509, %v505
    %v898 = vpack.c.b16 %v510, %v506
    %v899 = vpack.c.b16 %v515, %v511
    %v900 = vpack.c.b16 %v516, %v512
    %v901 = vpack.c.b16 %v517, %v513
    %v902 = vpack.c.b16 %v518, %v514
    %v903 = vpack.c.b16 %v523, %v519
    %v904 = vpack.c.b16 %v524, %v520
    %v905 = vpack.c.b16 %v525, %v521
    %v906 = vpack.c.b16 %v526, %v522
    %v907 = vpack.c.b16 %v531, %v527
    %v908 = vpack.c.b16 %v532, %v528
    %v909 = vpack.c.b16 %v533, %v529
    %v910 = vpack.c.b16 %v534, %v530
    %v911 = vpack.c.b16 %v539, %v535
    %v912 = vpack.c.b16 %v540, %v536
    %v913 = vpack.c.b16 %v541, %v537
    %v914 = vpack.c.b16 %v542, %v538
    %v915 = vpack.c.b16 %v547, %v543
    %v916 = vpack.c.b16 %v548, %v544
    %v917 = vpack.c.b16 %v549, %v545
    %v918 = vpack.c.b16 %v550, %v546
    %v919 = vpack.c.b16 %v555, %v551
    %v920 = vpack.c.b16 %v556, %v552
    %v921 = vpack.c.b16 %v557, %v553
    %v922 = vpack.c.b16 %v558, %v554
    %v923 = vpack.c.b16 %v563, %v559
    %v924 = vpack.c.b16 %v564, %v560
    %v925 = vpack.c.b16 %v565, %v561
    %v926 = vpack.c.b16 %v566, %v562
    %v927 = vpack.c.b16 %v571, %v567
    %v928 = vpack.c.b16 %v572, %v568
    %v929 = vpack.c.b16 %v573, %v569
    %v930 = vpack.c.b16 %v574, %v570
    %v931 = vpack.c.b16 %v579, %v575
    %v932 = vpack.c.b16 %v580, %v576
    %v933 = vpack.c.b16 %v581, %v577
    %v934 = vpack.c.b16 %v582, %v578
    %v935 = vpack.c.b16 %v587, %v583
    %v936 = vpack.c.b16 %v588, %v584
    %v937 = vpack.c.b16 %v589, %v585
    %v938 = vpack.c.b16 %v590, %v586
    %v939 = vpack.c.b16 %v595, %v591
    %v940 = vpack.c.b16 %v596, %v592
    %v941 = vpack.c.b16 %v597, %v593
    %v942 = vpack.c.b16 %v598, %v594
    %v943 = vpack.c.b16 %v603, %v599
    %v944 = vpack.c.b16 %v604, %v600
    %v945 = vpack.c.b16 %v605, %v601
    %v946 = vpack.c.b16 %v606, %v602
    %v947 = vpack.c.b16 %v611, %v607
    %v948 = vpack.c.b16 %v612, %v608
    %v949 = vpack.c.b16 %v613, %v609
    %v950 = vpack.c.b16 %v614, %v610
    %v951 = vpack.c.b16 %v619, %v615
    %v952 = vpack.c.b16 %v620, %v616
    %v953 = vpack.c.b16 %v621, %v617
    %v954 = vpack.c.b16 %v622, %v618
    %v955 = vpack.c.b16 %v627, %v623
    %v956 = vpack.c.b16 %v628, %v624
    %v957 = vpack.c.b16 %v629, %v625
    %v958 = vpack.c.b16 %v630, %v626
    %v959 = vpack.c.b16 %v635, %v631
    %v960 = vpack.c.b16 %v636, %v632
    %v961 = vpack.c.b16 %v637, %v633
    %v962 = vpack.c.b16 %v638, %v634
    %v963 = vpack.c.b16 %v643, %v639
    %v964 = vpack.c.b16 %v644, %v640
    %v965 = vpack.c.b16 %v645, %v641
    %v966 = vpack.c.b16 %v646, %v642
    %v967 = vpack.c.b16 %v651, %v647
    %v968 = vpack.c.b16 %v652, %v648
    %v969 = vpack.c.b16 %v653, %v649
    %v970 = vpack.c.b16 %v654, %v650
    %v971 = vpack.c.b16 %v659, %v655
    %v972 = vpack.c.b16 %v660, %v656
    %v973 = vpack.c.b16 %v661, %v657
    %v974 = vpack.c.b16 %v662, %v658
    %v975 = vpack.c.b16 %v667, %v663
    %v976 = vpack.c.b16 %v668, %v664
    %v977 = vpack.c.b16 %v669, %v665
    %v978 = vpack.c.b16 %v670, %v666
    %v979 = vpack.c.b16 %v675, %v671
    %v980 = vpack.c.b16 %v676, %v672
    %v981 = vpack.c.b16 %v677, %v673
    %v982 = vpack.c.b16 %v678, %v674
    %v983 = vpack.c.b16 %v683, %v679
    %v984 = vpack.c.b16 %v684, %v680
    %v985 = vpack.c.b16 %v685, %v681
    %v986 = vpack.c.b16 %v686, %v682
    %v987 = vpack.c.b16 %v691, %v687
    %v988 = vpack.c.b16 %v692, %v688
    %v989 = vpack.c.b16 %v693, %v689
    %v990 = vpack.c.b16 %v694, %v690
    %v991 = vpack.c.b16 %v699, %v695
    %v992 = vpack.c.b16 %v700, %v696
    %v993 = vpack.c.b16 %v701, %v697
    %v994 = vpack.c.b16 %v702, %v698
    %v995 = vpack.c.b16 %v707, %v703
    %v996 = vpack.c.b16 %v708, %v704
    %v997 = vpack.c.b16 %v709, %v705
    %v998 = vpack.c.b16 %v710, %v706
    %v999 = vpack.c.b16 %v715, %v711
    %v1000 = vpack.c.b16 %v716, %v712
    %v1001 = vpack.c.b16 %v717, %v713
    %v1002 = vpack.c.b16 %v718, %v714
    %v1003 = vpack.c.b16 %v723, %v719
    %v1004 = vpack.c.b16 %v724, %v720
    %v1005 = vpack.c.b16 %v725, %v721
    %v1006 = vpack.c.b16 %v726, %v722
    %v1007 = vpack.c.b16 %v731, %v727
    %v1008 = vpack.c.b16 %v732, %v728
    %v1009 = vpack.c.b16 %v733, %v729
    %v1010 = vpack.c.b16 %v734, %v730
    %v1011 = vpack.c.b16 %v739, %v735
    %v1012 = vpack.c.b16 %v740, %v736
    %v1013 = vpack.c.b16 %v741, %v737
    %v1014 = vpack.c.b16 %v742, %v738
    %v1015 = vpack.c.b16 %v747, %v743
    %v1016 = vpack.c.b16 %v748, %v744
    %v1017 = vpack.c.b16 %v749, %v745
    %v1018 = vpack.c.b16 %v750, %v746
    %v1019 = vpack.c.b16 %v755, %v751
    %v1020 = vpack.c.b16 %v756, %v752
    %v1021 = vpack.c.b16 %v757, %v753
    %v1022 = vpack.c.b16 %v758, %v754
    %v1023 = vpack.c.b16 %v763, %v759
    %v1024 = vpack.c.b16 %v764, %v760
    %v1025 = vpack.c.b16 %v765, %v761
    %v1026 = vpack.c.b16 %v766, %v762
    %v1027 = vpack.c.b16 %v771, %v767
    %v1028 = vpack.c.b16 %v772, %v768
    %v1029 = vpack.c.b16 %v773, %v769
    %v1030 = vpack.c.b16 %v774, %v770
    %v1031 = vpack.c.b16 %v779, %v775
    %v1032 = vpack.c.b16 %v780, %v776
    %v1033 = vpack.c.b16 %v781, %v777
    %v1034 = vpack.c.b16 %v782, %v778
    %v1035 = vpack.c.b16 %v787, %v783
    %v1036 = vpack.c.b16 %v788, %v784
    %v1037 = vpack.c.b16 %v789, %v785
    %v1038 = vpack.c.b16 %v790, %v786
    %v1039 = vpack.c.b16 %v795, %v791
    %v1040 = vpack.c.b16 %v796, %v792
    %v1041 = vpack.c.b16 %v797, %v793
    %v1042 = vpack.c.b16 %v798, %v794
    %v1043 = vpack.c.b16 %v803, %v799
    %v1044 = vpack.c.b16 %v804, %v800
    %v1045 = vpack.c.b16 %v805, %v801
    %v1046 = vpack.c.b16 %v806, %v802
    %v1047 = vpack.c.b16 %v811, %v807
    %v1048 = vpack.c.b16 %v812, %v808
    %v1049 = vpack.c.b16 %v813, %v809
    %v1050 = vpack.c.b16 %v814, %v810
    %v1051 = vpack.c.b16 %v819, %v815
    %v1052 = vpack.c.b16 %v820, %v816
    %v1053 = vpack.c.b16 %v821, %v817
    %v1054 = vpack.c.b16 %v822, %v818
    %v1055 = vpack.c.b16 %v827, %v823
    %v1056 = vpack.c.b16 %v828, %v824
    %v1057 = vpack.c.b16 %v829, %v825
    %v1058 = vpack.c.b16 %v830, %v826
    %v1059 = vpack.c.b16 %v835, %v831
    %v1060 = vpack.c.b16 %v836, %v832
    %v1061 = vpack.c.b16 %v837, %v833
    %v1062 = vpack.c.b16 %v838, %v834
    %v1063 = vpack.c.b16 %v843, %v839
    %v1064 = vpack.c.b16 %v844, %v840
    %v1065 = vpack.c.b16 %v845, %v841
    %v1066 = vpack.c.b16 %v846, %v842
    %v1067 = vpack.c.b16 %v851, %v847
    %v1068 = vpack.c.b16 %v852, %v848
    %v1069 = vpack.c.b16 %v853, %v849
    %v1070 = vpack.c.b16 %v854, %v850
    %v1071 = vpack.c.b16 %v859, %v855
    %v1072 = vpack.c.b16 %v860, %v856
    %v1073 = vpack.c.b16 %v861, %v857
    %v1074 = vpack.c.b16 %v862, %v858
    %v1075 = vpack.c.b16 %v867, %v863
    %v1076 = vpack.c.b16 %v868, %v864
    %v1077 = vpack.c.b16 %v869, %v865
    %v1078 = vpack.c.b16 %v870, %v866
    %v1079 = vpack.c.b16 %v875, %v871
    %v1080 = vpack.c.b16 %v876, %v872
    %v1081 = vpack.c.b16 %v877, %v873
    %v1082 = vpack.c.b16 %v878, %v874
    %v1083 = vpack.c.b16 %v883, %v879
    %v1084 = vpack.c.b16 %v884, %v880
    %v1085 = vpack.c.b16 %v885, %v881
    %v1086 = vpack.c.b16 %v886, %v882
    %v1087 = vpack.c.b16 %v891, %v887
    %v1088 = vpack.c.b16 %v892, %v888
    %v1089 = vpack.c.b16 %v893, %v889
    %v1090 = vpack.c.b16 %v894, %v890
    %vm1287 = vcmask 130048
    %v1289 = vsel %vm1287, %v88, 0
    %1291 = vmatprep.subr.bf16.mxu0 %v896
    %1292 = vmatpush1.bf16.msra.mxu0 %v895
    %1293 = vmatprep.subr.bf16.mxu0 %v900
    %1294 = vmatpush1.bf16.msra.mxu0 %v899
    %1295 = vmatprep.subr.bf16.mxu0 %v904
    %1296 = vmatpush1.bf16.msra.mxu0 %v903
    %1297 = vmatprep.subr.bf16.mxu0 %v908
    %1298 = vmatpush1.bf16.msra.mxu0 %v907
    %1299 = vmatprep.subr.bf16.mxu0 %v912
    %1300 = vmatpush1.bf16.msra.mxu0 %v911
    %1301 = vmatprep.subr.bf16.mxu0 %v916
    %1302 = vmatpush1.bf16.msra.mxu0 %v915
    %1303 = vmatprep.subr.bf16.mxu0 %v920
    %1304 = vmatpush1.bf16.msra.mxu0 %v919
    %1305 = vmatprep.subr.bf16.mxu0 %v924
    %1306 = vmatpush1.bf16.msra.mxu0 %v923
    %1307 = vmatprep.subr.bf16.mxu0 %v928
    %1308 = vmatpush1.bf16.msra.mxu0 %v927
    %1309 = vmatprep.subr.bf16.mxu0 %v932
    %1310 = vmatpush1.bf16.msra.mxu0 %v931
    %1311 = vmatprep.subr.bf16.mxu0 %v936
    %1312 = vmatpush1.bf16.msra.mxu0 %v935
    %1313 = vmatprep.subr.bf16.mxu0 %v940
    %1314 = vmatpush1.bf16.msra.mxu0 %v939
    %1315 = vmatprep.subr.bf16.mxu0 %v944
    %1316 = vmatpush1.bf16.msra.mxu0 %v943
    %1317 = vmatprep.subr.bf16.mxu0 %v948
    %1318 = vmatpush1.bf16.msra.mxu0 %v947
    %1319 = vmatprep.subr.bf16.mxu0 %v952
    %1320 = vmatpush1.bf16.msra.mxu0 %v951
    %1321 = vmatprep.subr.bf16.mxu0 %v956
    %1322 = vmatpush1.bf16.msra.mxu0 %v955
    %1323 = vmatprep.mubr.bf16.mxu0 %v83
    %1324 = vmatmul.mubr.bf16.gmra.mrb[0].mxu0 %v82
    %v1325 = vpop.f32.mrb[0].mxu0
    %v1326 = vadd.f32 %v290, %v1325
    %v1327 = vpop.f32.mrb[0].mxu0
    %v1328 = vadd.f32 %v294, %v1327
    %v1329 = vpop.f32.mrb[0].mxu0
    %v1330 = vadd.f32 %v290, %v1329
    %v1331 = vpop.f32.mrb[0].mxu0
    %v1332 = vadd.f32 %v294, %v1331
    %1333 = vdwg.mxu0
    %1334 = vmatprep.subr.bf16.mxu0 %v960
    %1335 = vmatpush1.bf16.msra.mxu0 %v959
    %1336 = vmatprep.subr.bf16.mxu0 %v964
    %1337 = vmatpush1.bf16.msra.mxu0 %v963
    %1338 = vmatprep.subr.bf16.mxu0 %v968
    %1339 = vmatpush1.bf16.msra.mxu0 %v967
    %1340 = vmatprep.subr.bf16.mxu0 %v972
    %1341 = vmatpush1.bf16.msra.mxu0 %v971
    %1342 = vmatprep.subr.bf16.mxu0 %v976
    %1343 = vmatpush1.bf16.msra.mxu0 %v975
    %1344 = vmatprep.subr.bf16.mxu0 %v980
    %1345 = vmatpush1.bf16.msra.mxu0 %v979
    %1346 = vmatprep.subr.bf16.mxu0 %v984
    %1347 = vmatpush1.bf16.msra.mxu0 %v983
    %1348 = vmatprep.subr.bf16.mxu0 %v988
    %1349 = vmatpush1.bf16.msra.mxu0 %v987
    %1350 = vmatprep.subr.bf16.mxu0 %v992
    %1351 = vmatpush1.bf16.msra.mxu0 %v991
    %1352 = vmatprep.subr.bf16.mxu0 %v996
    %1353 = vmatpush1.bf16.msra.mxu0 %v995
    %1354 = vmatprep.subr.bf16.mxu0 %v1000
    %1355 = vmatpush1.bf16.msra.mxu0 %v999
    %1356 = vmatprep.subr.bf16.mxu0 %v1004
    %1357 = vmatpush1.bf16.msra.mxu0 %v1003
    %1358 = vmatprep.subr.bf16.mxu0 %v1008
    %1359 = vmatpush1.bf16.msra.mxu0 %v1007
    %1360 = vmatprep.subr.bf16.mxu0 %v1012
    %1361 = vmatpush1.bf16.msra.mxu0 %v1011
    %1362 = vmatprep.subr.bf16.mxu0 %v1016
    %1363 = vmatpush1.bf16.msra.mxu0 %v1015
    %1364 = vmatprep.subr.bf16.mxu0 %v1020
    %1365 = vmatpush1.bf16.msra.mxu0 %v1019
    %1366 = vmatprep.mubr.bf16.mxu0 %v85
    %1367 = vmatmul.mubr.bf16.gmra.mrb[0].mxu0 %v84
    %v1368 = vpop.f32.mrb[0].mxu0
    %v1369 = vadd.f32 %v1326, %v1368
    %v1370 = vpop.f32.mrb[0].mxu0
    %v1371 = vadd.f32 %v1328, %v1370
    %v1372 = vpop.f32.mrb[0].mxu0
    %v1373 = vadd.f32 %v1330, %v1372
    %v1374 = vpop.f32.mrb[0].mxu0
    %v1375 = vadd.f32 %v1332, %v1374
    %1376 = vdwg.mxu0
    %1377 = vmatprep.subr.bf16.mxu0 %v1024
    %1378 = vmatpush1.bf16.msra.mxu0 %v1023
    %1379 = vmatprep.subr.bf16.mxu0 %v1028
    %1380 = vmatpush1.bf16.msra.mxu0 %v1027
    %1381 = vmatprep.subr.bf16.mxu0 %v1032
    %1382 = vmatpush1.bf16.msra.mxu0 %v1031
    %1383 = vmatprep.subr.bf16.mxu0 %v1036
    %1384 = vmatpush1.bf16.msra.mxu0 %v1035
    %1385 = vmatprep.subr.bf16.mxu0 %v1040
    %1386 = vmatpush1.bf16.msra.mxu0 %v1039
    %1387 = vmatprep.subr.bf16.mxu0 %v1044
    %1388 = vmatpush1.bf16.msra.mxu0 %v1043
    %1389 = vmatprep.subr.bf16.mxu0 %v1048
    %1390 = vmatpush1.bf16.msra.mxu0 %v1047
    %1391 = vmatprep.subr.bf16.mxu0 %v1052
    %1392 = vmatpush1.bf16.msra.mxu0 %v1051
    %1393 = vmatprep.subr.bf16.mxu0 %v1056
    %1394 = vmatpush1.bf16.msra.mxu0 %v1055
    %1395 = vmatprep.subr.bf16.mxu0 %v1060
    %1396 = vmatpush1.bf16.msra.mxu0 %v1059
    %1397 = vmatprep.subr.bf16.mxu0 %v1064
    %1398 = vmatpush1.bf16.msra.mxu0 %v1063
    %1399 = vmatprep.subr.bf16.mxu0 %v1068
    %1400 = vmatpush1.bf16.msra.mxu0 %v1067
    %1401 = vmatprep.subr.bf16.mxu0 %v1072
    %1402 = vmatpush1.bf16.msra.mxu0 %v1071
    %1403 = vmatprep.subr.bf16.mxu0 %v1076
    %1404 = vmatpush1.bf16.msra.mxu0 %v1075
    %1405 = vmatprep.subr.bf16.mxu0 %v1080
    %1406 = vmatpush1.bf16.msra.mxu0 %v1079
    %1407 = vmatprep.subr.bf16.mxu0 %v1084
    %1408 = vmatpush1.bf16.msra.mxu0 %v1083
    %1409 = vmatprep.mubr.bf16.mxu0 %v87
    %1410 = vmatmul.mubr.bf16.gmra.mrb[0].mxu0 %v86
    %v1411 = vpop.f32.mrb[0].mxu0
    %v1412 = vadd.f32 %v1369, %v1411
    %v1413 = vpop.f32.mrb[0].mxu0
    %v1414 = vadd.f32 %v1371, %v1413
    %v1415 = vpop.f32.mrb[0].mxu0
    %v1416 = vadd.f32 %v1373, %v1415
    %v1417 = vpop.f32.mrb[0].mxu0
    %v1418 = vadd.f32 %v1375, %v1417
    %1419 = vdwg.mxu0
    %1420 = vmatprep.subr.bf16.mxu0 %v1088
    %1421 = vmatpush1.bf16.msra.mxu0 %v1087
    %1422 = vmatprep.subr.bf16.mxu0 0
    %1423 = vmatpush1.bf16.msra.mxu0 0
    %1424 = vmatprep.subr.bf16.mxu0 0
    %1425 = vmatpush1.bf16.msra.mxu0 0
    %1426 = vmatprep.subr.bf16.mxu0 0
    %1427 = vmatpush1.bf16.msra.mxu0 0
    %1428 = vmatprep.subr.bf16.mxu0 0
    %1429 = vmatpush1.bf16.msra.mxu0 0
    %1430 = vmatprep.subr.bf16.mxu0 0
    %1431 = vmatpush1.bf16.msra.mxu0 0
    %1432 = vmatprep.subr.bf16.mxu0 0
    %1433 = vmatpush1.bf16.msra.mxu0 0
    %1434 = vmatprep.subr.bf16.mxu0 0
    %1435 = vmatpush1.bf16.msra.mxu0 0
    %1436 = vmatprep.subr.bf16.mxu0 0
    %1437 = vmatpush1.bf16.msra.mxu0 0
    %1438 = vmatprep.subr.bf16.mxu0 0
    %1439 = vmatpush1.bf16.msra.mxu0 0
    %1440 = vmatprep.subr.bf16.mxu0 0
    %1441 = vmatpush1.bf16.msra.mxu0 0
    %1442 = vmatprep.subr.bf16.mxu0 0
    %1443 = vmatpush1.bf16.msra.mxu0 0
    %1444 = vmatprep.subr.bf16.mxu0 0
    %1445 = vmatpush1.bf16.msra.mxu0 0
    %1446 = vmatprep.subr.bf16.mxu0 0
    %1447 = vmatpush1.bf16.msra.mxu0 0
    %1448 = vmatprep.subr.bf16.mxu0 0
    %1449 = vmatpush1.bf16.msra.mxu0 0
    %1450 = vmatprep.subr.bf16.mxu0 0
    %1451 = vmatpush1.bf16.msra.mxu0 0
    %1452 = vmatprep.mubr.bf16.mxu0 0
    %1453 = vmatmul.mubr.bf16.gmra.mrb[0].mxu0 %v1289
    %v1454 = vpop.f32.mrb[0].mxu0
    %v1455 = vadd.f32 %v1412, %v1454
    %v1456 = vpop.f32.mrb[0].mxu0
    %v1457 = vadd.f32 %v1414, %v1456
    %v1458 = vpop.f32.mrb[0].mxu0
    %v1459 = vadd.f32 %v1416, %v1458
    %v1460 = vpop.f32.mrb[0].mxu0
    %v1461 = vadd.f32 %v1418, %v1460
    %1462 = vdwg.mxu0
    %1463 = vmatprep.subr.bf16.mxu0 %v898
    %1464 = vmatpush1.bf16.msra.mxu0 %v897
    %1465 = vmatprep.subr.bf16.mxu0 %v902
    %1466 = vmatpush1.bf16.msra.mxu0 %v901
    %1467 = vmatprep.subr.bf16.mxu0 %v906
    %1468 = vmatpush1.bf16.msra.mxu0 %v905
    %1469 = vmatprep.subr.bf16.mxu0 %v910
    %1470 = vmatpush1.bf16.msra.mxu0 %v909
    %1471 = vmatprep.subr.bf16.mxu0 %v914
    %1472 = vmatpush1.bf16.msra.mxu0 %v913
    %1473 = vmatprep.subr.bf16.mxu0 %v918
    %1474 = vmatpush1.bf16.msra.mxu0 %v917
    %1475 = vmatprep.subr.bf16.mxu0 %v922
    %1476 = vmatpush1.bf16.msra.mxu0 %v921
    %1477 = vmatprep.subr.bf16.mxu0 %v926
    %1478 = vmatpush1.bf16.msra.mxu0 %v925
    %1479 = vmatprep.subr.bf16.mxu0 %v930
    %1480 = vmatpush1.bf16.msra.mxu0 %v929
    %1481 = vmatprep.subr.bf16.mxu0 %v934
    %1482 = vmatpush1.bf16.msra.mxu0 %v933
    %1483 = vmatprep.subr.bf16.mxu0 %v938
    %1484 = vmatpush1.bf16.msra.mxu0 %v937
    %1485 = vmatprep.subr.bf16.mxu0 %v942
    %1486 = vmatpush1.bf16.msra.mxu0 %v941
    %1487 = vmatprep.subr.bf16.mxu0 %v946
    %1488 = vmatpush1.bf16.msra.mxu0 %v945
    %1489 = vmatprep.subr.bf16.mxu0 %v950
    %1490 = vmatpush1.bf16.msra.mxu0 %v949
    %1491 = vmatprep.subr.bf16.mxu0 %v954
    %1492 = vmatpush1.bf16.msra.mxu0 %v953
    %1493 = vmatprep.subr.bf16.mxu0 %v958
    %1494 = vmatpush1.bf16.msra.mxu0 %v957
    %1495 = vmatprep.mubr.bf16.mxu0 %v83
    %1496 = vmatmul.mubr.bf16.gmra.mrb[0].mxu0 %v82
    %v1497 = vpop.f32.mrb[0].mxu0
    %v1498 = vadd.f32 %v298, %v1497
    %v1499 = vpop.f32.mrb[0].mxu0
    %v1500 = vadd.f32 %v302, %v1499
    %v1501 = vpop.f32.mrb[0].mxu0
    %v1502 = vadd.f32 %v298, %v1501
    %v1503 = vpop.f32.mrb[0].mxu0
    %v1504 = vadd.f32 %v302, %v1503
    %1505 = vdwg.mxu0
    %1506 = vmatprep.subr.bf16.mxu0 %v962
    %1507 = vmatpush1.bf16.msra.mxu0 %v961
    %1508 = vmatprep.subr.bf16.mxu0 %v966
    %1509 = vmatpush1.bf16.msra.mxu0 %v965
    %1510 = vmatprep.subr.bf16.mxu0 %v970
    %1511 = vmatpush1.bf16.msra.mxu0 %v969
    %1512 = vmatprep.subr.bf16.mxu0 %v974
    %1513 = vmatpush1.bf16.msra.mxu0 %v973
    %1514 = vmatprep.subr.bf16.mxu0 %v978
    %1515 = vmatpush1.bf16.msra.mxu0 %v977
    %1516 = vmatprep.subr.bf16.mxu0 %v982
    %1517 = vmatpush1.bf16.msra.mxu0 %v981
    %1518 = vmatprep.subr.bf16.mxu0 %v986
    %1519 = vmatpush1.bf16.msra.mxu0 %v985
    %1520 = vmatprep.subr.bf16.mxu0 %v990
    %1521 = vmatpush1.bf16.msra.mxu0 %v989
    %1522 = vmatprep.subr.bf16.mxu0 %v994
    %1523 = vmatpush1.bf16.msra.mxu0 %v993
    %1524 = vmatprep.subr.bf16.mxu0 %v998
    %1525 = vmatpush1.bf16.msra.mxu0 %v997
    %1526 = vmatprep.subr.bf16.mxu0 %v1002
    %1527 = vmatpush1.bf16.msra.mxu0 %v1001
    %1528 = vmatprep.subr.bf16.mxu0 %v1006
    %1529 = vmatpush1.bf16.msra.mxu0 %v1005
    %1530 = vmatprep.subr.bf16.mxu0 %v1010
    %1531 = vmatpush1.bf16.msra.mxu0 %v1009
    %1532 = vmatprep.subr.bf16.mxu0 %v1014
    %1533 = vmatpush1.bf16.msra.mxu0 %v1013
    %1534 = vmatprep.subr.bf16.mxu0 %v1018
    %1535 = vmatpush1.bf16.msra.mxu0 %v1017
    %1536 = vmatprep.subr.bf16.mxu0 %v1022
    %1537 = vmatpush1.bf16.msra.mxu0 %v1021
    %1538 = vmatprep.mubr.bf16.mxu0 %v85
    %1539 = vmatmul.mubr.bf16.gmra.mrb[0].mxu0 %v84
    %v1540 = vpop.f32.mrb[0].mxu0
    %v1541 = vadd.f32 %v1498, %v1540
    %v1542 = vpop.f32.mrb[0].mxu0
    %v1543 = vadd.f32 %v1500, %v1542
    %v1544 = vpop.f32.mrb[0].mxu0
    %v1545 = vadd.f32 %v1502, %v1544
    %v1546 = vpop.f32.mrb[0].mxu0
    %v1547 = vadd.f32 %v1504, %v1546
    %1548 = vdwg.mxu0
    %1549 = vmatprep.subr.bf16.mxu0 %v1026
    %1550 = vmatpush1.bf16.msra.mxu0 %v1025
    %1551 = vmatprep.subr.bf16.mxu0 %v1030
    %1552 = vmatpush1.bf16.msra.mxu0 %v1029
    %1553 = vmatprep.subr.bf16.mxu0 %v1034
    %1554 = vmatpush1.bf16.msra.mxu0 %v1033
    %1555 = vmatprep.subr.bf16.mxu0 %v1038
    %1556 = vmatpush1.bf16.msra.mxu0 %v1037
    %1557 = vmatprep.subr.bf16.mxu0 %v1042
    %1558 = vmatpush1.bf16.msra.mxu0 %v1041
    %1559 = vmatprep.subr.bf16.mxu0 %v1046
    %1560 = vmatpush1.bf16.msra.mxu0 %v1045
    %1561 = vmatprep.subr.bf16.mxu0 %v1050
    %1562 = vmatpush1.bf16.msra.mxu0 %v1049
    %1563 = vmatprep.subr.bf16.mxu0 %v1054
    %1564 = vmatpush1.bf16.msra.mxu0 %v1053
    %1565 = vmatprep.subr.bf16.mxu0 %v1058
    %1566 = vmatpush1.bf16.msra.mxu0 %v1057
    %1567 = vmatprep.subr.bf16.mxu0 %v1062
    %1568 = vmatpush1.bf16.msra.mxu0 %v1061
    %1569 = vmatprep.subr.bf16.mxu0 %v1066
    %1570 = vmatpush1.bf16.msra.mxu0 %v1065
    %1571 = vmatprep.subr.bf16.mxu0 %v1070
    %1572 = vmatpush1.bf16.msra.mxu0 %v1069
    %1573 = vmatprep.subr.bf16.mxu0 %v1074
    %1574 = vmatpush1.bf16.msra.mxu0 %v1073
    %1575 = vmatprep.subr.bf16.mxu0 %v1078
    %1576 = vmatpush1.bf16.msra.mxu0 %v1077
    %1577 = vmatprep.subr.bf16.mxu0 %v1082
    %1578 = vmatpush1.bf16.msra.mxu0 %v1081
    %1579 = vmatprep.subr.bf16.mxu0 %v1086
    %1580 = vmatpush1.bf16.msra.mxu0 %v1085
    %1581 = vmatprep.mubr.bf16.mxu0 %v87
    %1582 = vmatmul.mubr.bf16.gmra.mrb[0].mxu0 %v86
    %v1583 = vpop.f32.mrb[0].mxu0
    %v1584 = vadd.f32 %v1541, %v1583
    %v1585 = vpop.f32.mrb[0].mxu0
    %v1586 = vadd.f32 %v1543, %v1585
    %v1587 = vpop.f32.mrb[0].mxu0
    %v1588 = vadd.f32 %v1545, %v1587
    %v1589 = vpop.f32.mrb[0].mxu0
    %v1590 = vadd.f32 %v1547, %v1589
    %1591 = vdwg.mxu0
    %1592 = vmatprep.subr.bf16.mxu0 %v1090
    %1593 = vmatpush1.bf16.msra.mxu0 %v1089
    %1594 = vmatprep.subr.bf16.mxu0 0
    %1595 = vmatpush1.bf16.msra.mxu0 0
    %1596 = vmatprep.subr.bf16.mxu0 0
    %1597 = vmatpush1.bf16.msra.mxu0 0
    %1598 = vmatprep.subr.bf16.mxu0 0
    %1599 = vmatpush1.bf16.msra.mxu0 0
    %1600 = vmatprep.subr.bf16.mxu0 0
    %1601 = vmatpush1.bf16.msra.mxu0 0
    %1602 = vmatprep.subr.bf16.mxu0 0
    %1603 = vmatpush1.bf16.msra.mxu0 0
    %1604 = vmatprep.subr.bf16.mxu0 0
    %1605 = vmatpush1.bf16.msra.mxu0 0
    %1606 = vmatprep.subr.bf16.mxu0 0
    %1607 = vmatpush1.bf16.msra.mxu0 0
    %1608 = vmatprep.subr.bf16.mxu0 0
    %1609 = vmatpush1.bf16.msra.mxu0 0
    %1610 = vmatprep.subr.bf16.mxu0 0
    %1611 = vmatpush1.bf16.msra.mxu0 0
    %1612 = vmatprep.subr.bf16.mxu0 0
    %1613 = vmatpush1.bf16.msra.mxu0 0
    %1614 = vmatprep.subr.bf16.mxu0 0
    %1615 = vmatpush1.bf16.msra.mxu0 0
    %1616 = vmatprep.subr.bf16.mxu0 0
    %1617 = vmatpush1.bf16.msra.mxu0 0
    %1618 = vmatprep.subr.bf16.mxu0 0
    %1619 = vmatpush1.bf16.msra.mxu0 0
    %1620 = vmatprep.subr.bf16.mxu0 0
    %1621 = vmatpush1.bf16.msra.mxu0 0
    %1622 = vmatprep.subr.bf16.mxu0 0
    %1623 = vmatpush1.bf16.msra.mxu0 0
    %1624 = vmatprep.mubr.bf16.mxu0 0
    %1625 = vmatmul.mubr.bf16.gmra.mrb[0].mxu0 %v1289
    %v1626 = vpop.f32.mrb[0].mxu0
    %v1627 = vadd.f32 %v1584, %v1626
    %v1628 = vpop.f32.mrb[0].mxu0
    %v1629 = vadd.f32 %v1586, %v1628
    %v1630 = vpop.f32.mrb[0].mxu0
    %v1631 = vadd.f32 %v1588, %v1630
    %v1632 = vpop.f32.mrb[0].mxu0
    %v1633 = vadd.f32 %v1590, %v1632
    %1634 = vdwg.mxu0
    %v1635 = vmax.f32 %v1455, 0.0
    %v1636 = vmax.f32 %v1457, 0.0
    %v1637 = vmax.f32 %v1627, 0.0
    %v1638 = vmax.f32 %v1629, 0.0
    %v1639 = vmax.f32 %v1459, 0.0
    %v1640 = vmax.f32 %v1461, 0.0
    %v1641 = vmax.f32 %v1631, 0.0
    %v1642 = vmax.f32 %v1633, 0.0
    %v1643 = vpack.c.bf16 %v1639, %v1635
    %v1644 = vpack.c.bf16 %v1640, %v1636
    %v1645 = vpack.c.bf16 %v1641, %v1637
    %v1646 = vpack.c.bf16 %v1642, %v1638
    %v1647 = vld [vmem:[#allocation4] sm:$0xff]
    %v1648 = vld [vmem:[#allocation4 + $0x8] sm:$0xff]
    %v1649 = vld [vmem:[#allocation4 + $0x10] sm:$0xff]
    %v1650 = vld [vmem:[#allocation4 + $0x18] sm:$0xff]
    %v1651 = vld [vmem:[#allocation4 + $0x20] sm:$0xff]
    %v1652 = vld [vmem:[#allocation4 + $0x28] sm:$0xff]
    %v1653 = vld [vmem:[#allocation4 + $0x30] sm:$0xff]
    %v1654 = vld [vmem:[#allocation4 + $0x38] sm:$0xff]
    %v1655 = vld [vmem:[#allocation4 + $0x40] sm:$0xff]
    %v1656 = vld [vmem:[#allocation4 + $0x48] sm:$0xff]
    %v1657 = vld [vmem:[#allocation4 + $0x50] sm:$0xff]
    %v1658 = vld [vmem:[#allocation4 + $0x58] sm:$0xff]
    %v1659 = vld [vmem:[#allocation4 + $0x60] sm:$0xff]
    %v1660 = vld [vmem:[#allocation4 + $0x68] sm:$0xff]
    %v1661 = vld [vmem:[#allocation4 + $0x70] sm:$0xff]
    %v1662 = vld [vmem:[#allocation4 + $0x78] sm:$0xff]
    %v1663 = vld [vmem:[#allocation4 + $0x80] sm:$0xff]
    %v1664 = vld [vmem:[#allocation4 + $0x88] sm:$0xff]
    %v1665 = vld [vmem:[#allocation4 + $0x90] sm:$0xff]
    %v1666 = vld [vmem:[#allocation4 + $0x98] sm:$0xff]
    %v1667 = vld [vmem:[#allocation4 + $0xa0] sm:$0xff]
    %v1668 = vld [vmem:[#allocation4 + $0xa8] sm:$0xff]
    %v1669 = vld [vmem:[#allocation4 + $0xb0] sm:$0xff]
    %v1670 = vld [vmem:[#allocation4 + $0xb8] sm:$0xff]
    %v1671 = vld [vmem:[#allocation4 + $0xc0] sm:$0xff]
    %v1672 = vld [vmem:[#allocation4 + $0xc8] sm:$0xff]
    %v1673 = vld [vmem:[#allocation4 + $0xd0] sm:$0xff]
    %v1674 = vld [vmem:[#allocation4 + $0xd8] sm:$0xff]
    %v1675 = vld [vmem:[#allocation4 + $0xe0] sm:$0xff]
    %v1676 = vld [vmem:[#allocation4 + $0xe8] sm:$0xff]
    %v1677 = vld [vmem:[#allocation4 + $0xf0] sm:$0xff]
    %v1678 = vld [vmem:[#allocation4 + $0xf8] sm:$0xff]
    %v1679 = vld [vmem:[#allocation4 + $0x100] sm:$0xff]
    %v1680 = vld [vmem:[#allocation4 + $0x108] sm:$0xff]
    %v1681 = vld [vmem:[#allocation4 + $0x110] sm:$0xff]
    %v1682 = vld [vmem:[#allocation4 + $0x118] sm:$0xff]
    %v1683 = vld [vmem:[#allocation4 + $0x120] sm:$0xff]
    %v1684 = vld [vmem:[#allocation4 + $0x128] sm:$0xff]
    %v1685 = vld [vmem:[#allocation4 + $0x130] sm:$0xff]
    %v1686 = vld [vmem:[#allocation4 + $0x138] sm:$0xff]
    %v1687 = vld [vmem:[#allocation4 + $0x140] sm:$0xff]
    %v1688 = vld [vmem:[#allocation4 + $0x148] sm:$0xff]
    %v1689 = vld [vmem:[#allocation4 + $0x150] sm:$0xff]
    %v1690 = vld [vmem:[#allocation4 + $0x158] sm:$0xff]
    %v1691 = vld [vmem:[#allocation4 + $0x160] sm:$0xff]
    %v1692 = vld [vmem:[#allocation4 + $0x168] sm:$0xff]
    %v1693 = vld [vmem:[#allocation4 + $0x170] sm:$0xff]
    %v1694 = vld [vmem:[#allocation4 + $0x178] sm:$0xff]
    %v1695 = vld [vmem:[#allocation4 + $0x180] sm:$0xff]
    %v1696 = vld [vmem:[#allocation4 + $0x188] sm:$0xff]
    %v1697 = vld [vmem:[#allocation4 + $0x190] sm:$0xff]
    %v1698 = vld [vmem:[#allocation4 + $0x198] sm:$0xff]
    %v1699 = vld [vmem:[#allocation4 + $0x1a0] sm:$0xff]
    %v1700 = vld [vmem:[#allocation4 + $0x1a8] sm:$0xff]
    %v1701 = vld [vmem:[#allocation4 + $0x1b0] sm:$0xff]
    %v1702 = vld [vmem:[#allocation4 + $0x1b8] sm:$0xff]
    %v1703 = vld [vmem:[#allocation4 + $0x1c0] sm:$0xff]
    %v1704 = vld [vmem:[#allocation4 + $0x1c8] sm:$0xff]
    %v1705 = vld [vmem:[#allocation4 + $0x1d0] sm:$0xff]
    %v1706 = vld [vmem:[#allocation4 + $0x1d8] sm:$0xff]
    %v1707 = vld [vmem:[#allocation4 + $0x1e0] sm:$0xff]
    %v1708 = vld [vmem:[#allocation4 + $0x1e8] sm:$0xff]
    %v1709 = vld [vmem:[#allocation4 + $0x1f0] sm:$0xff]
    %v1710 = vld [vmem:[#allocation4 + $0x1f8] sm:$0xff]
    %v1711 = vld [vmem:[#allocation4 + $0x200] sm:$0xff]
    %v1712 = vld [vmem:[#allocation4 + $0x208] sm:$0xff]
    %v1713 = vld [vmem:[#allocation4 + $0x210] sm:$0xff]
    %v1714 = vld [vmem:[#allocation4 + $0x218] sm:$0xff]
    %v1715 = vld [vmem:[#allocation4 + $0x220] sm:$0xff]
    %v1716 = vld [vmem:[#allocation4 + $0x228] sm:$0xff]
    %v1717 = vld [vmem:[#allocation4 + $0x230] sm:$0xff]
    %v1718 = vld [vmem:[#allocation4 + $0x238] sm:$0xff]
    %v1719 = vld [vmem:[#allocation4 + $0x240] sm:$0xff]
    %v1720 = vld [vmem:[#allocation4 + $0x248] sm:$0xff]
    %v1721 = vld [vmem:[#allocation4 + $0x250] sm:$0xff]
    %v1722 = vld [vmem:[#allocation4 + $0x258] sm:$0xff]
    %v1723 = vld [vmem:[#allocation4 + $0x260] sm:$0xff]
    %v1724 = vld [vmem:[#allocation4 + $0x268] sm:$0xff]
    %v1725 = vld [vmem:[#allocation4 + $0x270] sm:$0xff]
    %v1726 = vld [vmem:[#allocation4 + $0x278] sm:$0xff]
    %v1727 = vld [vmem:[#allocation4 + $0x280] sm:$0xff]
    %v1728 = vld [vmem:[#allocation4 + $0x288] sm:$0xff]
    %v1729 = vld [vmem:[#allocation4 + $0x290] sm:$0xff]
    %v1730 = vld [vmem:[#allocation4 + $0x298] sm:$0xff]
    %v1731 = vld [vmem:[#allocation4 + $0x2a0] sm:$0xff]
    %v1732 = vld [vmem:[#allocation4 + $0x2a8] sm:$0xff]
    %v1733 = vld [vmem:[#allocation4 + $0x2b0] sm:$0xff]
    %v1734 = vld [vmem:[#allocation4 + $0x2b8] sm:$0xff]
    %v1735 = vld [vmem:[#allocation4 + $0x2c0] sm:$0xff]
    %v1736 = vld [vmem:[#allocation4 + $0x2c8] sm:$0xff]
    %v1737 = vld [vmem:[#allocation4 + $0x2d0] sm:$0xff]
    %v1738 = vld [vmem:[#allocation4 + $0x2d8] sm:$0xff]
    %v1739 = vld [vmem:[#allocation4 + $0x2e0] sm:$0xff]
    %v1740 = vld [vmem:[#allocation4 + $0x2e8] sm:$0xff]
    %v1741 = vld [vmem:[#allocation4 + $0x2f0] sm:$0xff]
    %v1742 = vld [vmem:[#allocation4 + $0x2f8] sm:$0xff]
    %v1743 = vld [vmem:[#allocation4 + $0x300] sm:$0xff]
    %v1744 = vld [vmem:[#allocation4 + $0x308] sm:$0xff]
    %v1745 = vld [vmem:[#allocation4 + $0x310] sm:$0xff]
    %v1746 = vld [vmem:[#allocation4 + $0x318] sm:$0xff]
    %v1747 = vld [vmem:[#allocation4 + $0x320] sm:$0xff]
    %v1748 = vld [vmem:[#allocation4 + $0x328] sm:$0xff]
    %v1749 = vld [vmem:[#allocation4 + $0x330] sm:$0xff]
    %v1750 = vld [vmem:[#allocation4 + $0x338] sm:$0xff]
    %v1751 = vld [vmem:[#allocation4 + $0x340] sm:$0xff]
    %v1752 = vld [vmem:[#allocation4 + $0x348] sm:$0xff]
    %v1753 = vld [vmem:[#allocation4 + $0x350] sm:$0xff]
    %v1754 = vld [vmem:[#allocation4 + $0x358] sm:$0xff]
    %v1755 = vld [vmem:[#allocation4 + $0x360] sm:$0xff]
    %v1756 = vld [vmem:[#allocation4 + $0x368] sm:$0xff]
    %v1757 = vld [vmem:[#allocation4 + $0x370] sm:$0xff]
    %v1758 = vld [vmem:[#allocation4 + $0x378] sm:$0xff]
    %v1759 = vld [vmem:[#allocation4 + $0x380] sm:$0xff]
    %v1760 = vld [vmem:[#allocation4 + $0x388] sm:$0xff]
    %v1761 = vld [vmem:[#allocation4 + $0x390] sm:$0xff]
    %v1762 = vld [vmem:[#allocation4 + $0x398] sm:$0xff]
    %v1763 = vld [vmem:[#allocation4 + $0x3a0] sm:$0xff]
    %v1764 = vld [vmem:[#allocation4 + $0x3a8] sm:$0xff]
    %v1765 = vld [vmem:[#allocation4 + $0x3b0] sm:$0xff]
    %v1766 = vld [vmem:[#allocation4 + $0x3b8] sm:$0xff]
    %v1767 = vld [vmem:[#allocation4 + $0x3c0] sm:$0xff]
    %v1768 = vld [vmem:[#allocation4 + $0x3c8] sm:$0xff]
    %v1769 = vld [vmem:[#allocation4 + $0x3d0] sm:$0xff]
    %v1770 = vld [vmem:[#allocation4 + $0x3d8] sm:$0xff]
    %v1771 = vld [vmem:[#allocation4 + $0x3e0] sm:$0xff]
    %v1772 = vld [vmem:[#allocation4 + $0x3e8] sm:$0xff]
    %v1773 = vld [vmem:[#allocation4 + $0x3f0] sm:$0xff]
    %v1774 = vld [vmem:[#allocation4 + $0x3f8] sm:$0xff]
    %v1775 = vld [vmem:[%s4] sm:$0xf]
    %v1777 = vlaneseq
    %v1778 = vshrl.u32 %v1777, 7
    %v1779 = vsub.s32 0, %v1778
    %v1780 = vrot.slane %v1775, %v1779
    %v1781 = vlaneseq
    %v1782 = vshrl.u32 %v1781, 7
    %v1783 = vsub.s32 1, %v1782
    %v1784 = vrot.slane %v1775, %v1783
    %v1785 = vlaneseq
    %v1786 = vshrl.u32 %v1785, 7
    %v1787 = vsub.s32 2, %v1786
    %v1788 = vrot.slane %v1775, %v1787
    %v1789 = vlaneseq
    %v1790 = vshrl.u32 %v1789, 7
    %v1791 = vsub.s32 3, %v1790
    %v1792 = vrot.slane %v1775, %v1791
    %v1925 = vunpack.c.l.b16 %v1647
    %v1926 = vunpack.c.h.b16 %v1647
    %v1927 = vunpack.c.l.b16 %v1648
    %v1928 = vunpack.c.h.b16 %v1648
    %v1929 = vunpack.c.l.b16 %v1649
    %v1930 = vunpack.c.h.b16 %v1649
    %v1931 = vunpack.c.l.b16 %v1650
    %v1932 = vunpack.c.h.b16 %v1650
    %v1933 = vunpack.c.l.b16 %v1651
    %v1934 = vunpack.c.h.b16 %v1651
    %v1935 = vunpack.c.l.b16 %v1652
    %v1936 = vunpack.c.h.b16 %v1652
    %v1937 = vunpack.c.l.b16 %v1653
    %v1938 = vunpack.c.h.b16 %v1653
    %v1939 = vunpack.c.l.b16 %v1654
    %v1940 = vunpack.c.h.b16 %v1654
    %v1941 = vunpack.c.l.b16 %v1655
    %v1942 = vunpack.c.h.b16 %v1655
    %v1943 = vunpack.c.l.b16 %v1656
    %v1944 = vunpack.c.h.b16 %v1656
    %v1945 = vunpack.c.l.b16 %v1657
    %v1946 = vunpack.c.h.b16 %v1657
    %v1947 = vunpack.c.l.b16 %v1658
    %v1948 = vunpack.c.h.b16 %v1658
    %v1949 = vunpack.c.l.b16 %v1659
    %v1950 = vunpack.c.h.b16 %v1659
    %v1951 = vunpack.c.l.b16 %v1660
    %v1952 = vunpack.c.h.b16 %v1660
    %v1953 = vunpack.c.l.b16 %v1661
    %v1954 = vunpack.c.h.b16 %v1661
    %v1955 = vunpack.c.l.b16 %v1662
    %v1956 = vunpack.c.h.b16 %v1662
    %v1957 = vunpack.c.l.b16 %v1663
    %v1958 = vunpack.c.h.b16 %v1663
    %v1959 = vunpack.c.l.b16 %v1664
    %v1960 = vunpack.c.h.b16 %v1664
    %v1961 = vunpack.c.l.b16 %v1665
    %v1962 = vunpack.c.h.b16 %v1665
    %v1963 = vunpack.c.l.b16 %v1666
    %v1964 = vunpack.c.h.b16 %v1666
    %v1965 = vunpack.c.l.b16 %v1667
    %v1966 = vunpack.c.h.b16 %v1667
    %v1967 = vunpack.c.l.b16 %v1668
    %v1968 = vunpack.c.h.b16 %v1668
    %v1969 = vunpack.c.l.b16 %v1669
    %v1970 = vunpack.c.h.b16 %v1669
    %v1971 = vunpack.c.l.b16 %v1670
    %v1972 = vunpack.c.h.b16 %v1670
    %v1973 = vunpack.c.l.b16 %v1671
    %v1974 = vunpack.c.h.b16 %v1671
    %v1975 = vunpack.c.l.b16 %v1672
    %v1976 = vunpack.c.h.b16 %v1672
    %v1977 = vunpack.c.l.b16 %v1673
    %v1978 = vunpack.c.h.b16 %v1673
    %v1979 = vunpack.c.l.b16 %v1674
    %v1980 = vunpack.c.h.b16 %v1674
    %v1981 = vunpack.c.l.b16 %v1675
    %v1982 = vunpack.c.h.b16 %v1675
    %v1983 = vunpack.c.l.b16 %v1676
    %v1984 = vunpack.c.h.b16 %v1676
    %v1985 = vunpack.c.l.b16 %v1677
    %v1986 = vunpack.c.h.b16 %v1677
    %v1987 = vunpack.c.l.b16 %v1678
    %v1988 = vunpack.c.h.b16 %v1678
    %v1989 = vunpack.c.l.b16 %v1679
    %v1990 = vunpack.c.h.b16 %v1679
    %v1991 = vunpack.c.l.b16 %v1680
    %v1992 = vunpack.c.h.b16 %v1680
    %v1993 = vunpack.c.l.b16 %v1681
    %v1994 = vunpack.c.h.b16 %v1681
    %v1995 = vunpack.c.l.b16 %v1682
    %v1996 = vunpack.c.h.b16 %v1682
    %v1997 = vunpack.c.l.b16 %v1683
    %v1998 = vunpack.c.h.b16 %v1683
    %v1999 = vunpack.c.l.b16 %v1684
    %v2000 = vunpack.c.h.b16 %v1684
    %v2001 = vunpack.c.l.b16 %v1685
    %v2002 = vunpack.c.h.b16 %v1685
    %v2003 = vunpack.c.l.b16 %v1686
    %v2004 = vunpack.c.h.b16 %v1686
    %v2005 = vunpack.c.l.b16 %v1687
    %v2006 = vunpack.c.h.b16 %v1687
    %v2007 = vunpack.c.l.b16 %v1688
    %v2008 = vunpack.c.h.b16 %v1688
    %v2009 = vunpack.c.l.b16 %v1689
    %v2010 = vunpack.c.h.b16 %v1689
    %v2011 = vunpack.c.l.b16 %v1690
    %v2012 = vunpack.c.h.b16 %v1690
    %v2013 = vunpack.c.l.b16 %v1691
    %v2014 = vunpack.c.h.b16 %v1691
    %v2015 = vunpack.c.l.b16 %v1692
    %v2016 = vunpack.c.h.b16 %v1692
    %v2017 = vunpack.c.l.b16 %v1693
    %v2018 = vunpack.c.h.b16 %v1693
    %v2019 = vunpack.c.l.b16 %v1694
    %v2020 = vunpack.c.h.b16 %v1694
    %v2021 = vunpack.c.l.b16 %v1695
    %v2022 = vunpack.c.h.b16 %v1695
    %v2023 = vunpack.c.l.b16 %v1696
    %v2024 = vunpack.c.h.b16 %v1696
    %v2025 = vunpack.c.l.b16 %v1697
    %v2026 = vunpack.c.h.b16 %v1697
    %v2027 = vunpack.c.l.b16 %v1698
    %v2028 = vunpack.c.h.b16 %v1698
    %v2029 = vunpack.c.l.b16 %v1699
    %v2030 = vunpack.c.h.b16 %v1699
    %v2031 = vunpack.c.l.b16 %v1700
    %v2032 = vunpack.c.h.b16 %v1700
    %v2033 = vunpack.c.l.b16 %v1701
    %v2034 = vunpack.c.h.b16 %v1701
    %v2035 = vunpack.c.l.b16 %v1702
    %v2036 = vunpack.c.h.b16 %v1702
    %v2037 = vunpack.c.l.b16 %v1703
    %v2038 = vunpack.c.h.b16 %v1703
    %v2039 = vunpack.c.l.b16 %v1704
    %v2040 = vunpack.c.h.b16 %v1704
    %v2041 = vunpack.c.l.b16 %v1705
    %v2042 = vunpack.c.h.b16 %v1705
    %v2043 = vunpack.c.l.b16 %v1706
    %v2044 = vunpack.c.h.b16 %v1706
    %v2045 = vunpack.c.l.b16 %v1707
    %v2046 = vunpack.c.h.b16 %v1707
    %v2047 = vunpack.c.l.b16 %v1708
    %v2048 = vunpack.c.h.b16 %v1708
    %v2049 = vunpack.c.l.b16 %v1709
    %v2050 = vunpack.c.h.b16 %v1709
    %v2051 = vunpack.c.l.b16 %v1710
    %v2052 = vunpack.c.h.b16 %v1710
    %v2053 = vunpack.c.l.b16 %v1711
    %v2054 = vunpack.c.h.b16 %v1711
    %v2055 = vunpack.c.l.b16 %v1712
    %v2056 = vunpack.c.h.b16 %v1712
    %v2057 = vunpack.c.l.b16 %v1713
    %v2058 = vunpack.c.h.b16 %v1713
    %v2059 = vunpack.c.l.b16 %v1714
    %v2060 = vunpack.c.h.b16 %v1714
    %v2061 = vunpack.c.l.b16 %v1715
    %v2062 = vunpack.c.h.b16 %v1715
    %v2063 = vunpack.c.l.b16 %v1716
    %v2064 = vunpack.c.h.b16 %v1716
    %v2065 = vunpack.c.l.b16 %v1717
    %v2066 = vunpack.c.h.b16 %v1717
    %v2067 = vunpack.c.l.b16 %v1718
    %v2068 = vunpack.c.h.b16 %v1718
    %v2069 = vunpack.c.l.b16 %v1719
    %v2070 = vunpack.c.h.b16 %v1719
    %v2071 = vunpack.c.l.b16 %v1720
    %v2072 = vunpack.c.h.b16 %v1720
    %v2073 = vunpack.c.l.b16 %v1721
    %v2074 = vunpack.c.h.b16 %v1721
    %v2075 = vunpack.c.l.b16 %v1722
    %v2076 = vunpack.c.h.b16 %v1722
    %v2077 = vunpack.c.l.b16 %v1723
    %v2078 = vunpack.c.h.b16 %v1723
    %v2079 = vunpack.c.l.b16 %v1724
    %v2080 = vunpack.c.h.b16 %v1724
    %v2081 = vunpack.c.l.b16 %v1725
    %v2082 = vunpack.c.h.b16 %v1725
    %v2083 = vunpack.c.l.b16 %v1726
    %v2084 = vunpack.c.h.b16 %v1726
    %v2085 = vunpack.c.l.b16 %v1727
    %v2086 = vunpack.c.h.b16 %v1727
    %v2087 = vunpack.c.l.b16 %v1728
    %v2088 = vunpack.c.h.b16 %v1728
    %v2089 = vunpack.c.l.b16 %v1729
    %v2090 = vunpack.c.h.b16 %v1729
    %v2091 = vunpack.c.l.b16 %v1730
    %v2092 = vunpack.c.h.b16 %v1730
    %v2093 = vunpack.c.l.b16 %v1731
    %v2094 = vunpack.c.h.b16 %v1731
    %v2095 = vunpack.c.l.b16 %v1732
    %v2096 = vunpack.c.h.b16 %v1732
    %v2097 = vunpack.c.l.b16 %v1733
    %v2098 = vunpack.c.h.b16 %v1733
    %v2099 = vunpack.c.l.b16 %v1734
    %v2100 = vunpack.c.h.b16 %v1734
    %v2101 = vunpack.c.l.b16 %v1735
    %v2102 = vunpack.c.h.b16 %v1735
    %v2103 = vunpack.c.l.b16 %v1736
    %v2104 = vunpack.c.h.b16 %v1736
    %v2105 = vunpack.c.l.b16 %v1737
    %v2106 = vunpack.c.h.b16 %v1737
    %v2107 = vunpack.c.l.b16 %v1738
    %v2108 = vunpack.c.h.b16 %v1738
    %v2109 = vunpack.c.l.b16 %v1739
    %v2110 = vunpack.c.h.b16 %v1739
    %v2111 = vunpack.c.l.b16 %v1740
    %v2112 = vunpack.c.h.b16 %v1740
    %v2113 = vunpack.c.l.b16 %v1741
    %v2114 = vunpack.c.h.b16 %v1741
    %v2115 = vunpack.c.l.b16 %v1742
    %v2116 = vunpack.c.h.b16 %v1742
    %v2117 = vunpack.c.l.b16 %v1743
    %v2118 = vunpack.c.h.b16 %v1743
    %v2119 = vunpack.c.l.b16 %v1744
    %v2120 = vunpack.c.h.b16 %v1744
    %v2121 = vunpack.c.l.b16 %v1745
    %v2122 = vunpack.c.h.b16 %v1745
    %v2123 = vunpack.c.l.b16 %v1746
    %v2124 = vunpack.c.h.b16 %v1746
    %v2125 = vunpack.c.l.b16 %v1747
    %v2126 = vunpack.c.h.b16 %v1747
    %v2127 = vunpack.c.l.b16 %v1748
    %v2128 = vunpack.c.h.b16 %v1748
    %v2129 = vunpack.c.l.b16 %v1749
    %v2130 = vunpack.c.h.b16 %v1749
    %v2131 = vunpack.c.l.b16 %v1750
    %v2132 = vunpack.c.h.b16 %v1750
    %v2133 = vunpack.c.l.b16 %v1751
    %v2134 = vunpack.c.h.b16 %v1751
    %v2135 = vunpack.c.l.b16 %v1752
    %v2136 = vunpack.c.h.b16 %v1752
    %v2137 = vunpack.c.l.b16 %v1753
    %v2138 = vunpack.c.h.b16 %v1753
    %v2139 = vunpack.c.l.b16 %v1754
    %v2140 = vunpack.c.h.b16 %v1754
    %v2141 = vunpack.c.l.b16 %v1755
    %v2142 = vunpack.c.h.b16 %v1755
    %v2143 = vunpack.c.l.b16 %v1756
    %v2144 = vunpack.c.h.b16 %v1756
    %v2145 = vunpack.c.l.b16 %v1757
    %v2146 = vunpack.c.h.b16 %v1757
    %v2147 = vunpack.c.l.b16 %v1758
    %v2148 = vunpack.c.h.b16 %v1758
    %v2149 = vunpack.c.l.b16 %v1759
    %v2150 = vunpack.c.h.b16 %v1759
    %v2151 = vunpack.c.l.b16 %v1760
    %v2152 = vunpack.c.h.b16 %v1760
    %v2153 = vunpack.c.l.b16 %v1761
    %v2154 = vunpack.c.h.b16 %v1761
    %v2155 = vunpack.c.l.b16 %v1762
    %v2156 = vunpack.c.h.b16 %v1762
    %v2157 = vunpack.c.l.b16 %v1763
    %v2158 = vunpack.c.h.b16 %v1763
    %v2159 = vunpack.c.l.b16 %v1764
    %v2160 = vunpack.c.h.b16 %v1764
    %v2161 = vunpack.c.l.b16 %v1765
    %v2162 = vunpack.c.h.b16 %v1765
    %v2163 = vunpack.c.l.b16 %v1766
    %v2164 = vunpack.c.h.b16 %v1766
    %v2165 = vunpack.c.l.b16 %v1767
    %v2166 = vunpack.c.h.b16 %v1767
    %v2167 = vunpack.c.l.b16 %v1768
    %v2168 = vunpack.c.h.b16 %v1768
    %v2169 = vunpack.c.l.b16 %v1769
    %v2170 = vunpack.c.h.b16 %v1769
    %v2171 = vunpack.c.l.b16 %v1770
    %v2172 = vunpack.c.h.b16 %v1770
    %v2173 = vunpack.c.l.b16 %v1771
    %v2174 = vunpack.c.h.b16 %v1771
    %v2175 = vunpack.c.l.b16 %v1772
    %v2176 = vunpack.c.h.b16 %v1772
    %v2177 = vunpack.c.l.b16 %v1773
    %v2178 = vunpack.c.h.b16 %v1773
    %v2179 = vunpack.c.l.b16 %v1774
    %v2180 = vunpack.c.h.b16 %v1774
    %v2181 = vpack.c.b16 %v1929, %v1925
    %v2182 = vpack.c.b16 %v1930, %v1926
    %v2183 = vpack.c.b16 %v1931, %v1927
    %v2184 = vpack.c.b16 %v1932, %v1928
    %v2185 = vpack.c.b16 %v1937, %v1933
    %v2186 = vpack.c.b16 %v1938, %v1934
    %v2187 = vpack.c.b16 %v1939, %v1935
    %v2188 = vpack.c.b16 %v1940, %v1936
    %v2189 = vpack.c.b16 %v1945, %v1941
    %v2190 = vpack.c.b16 %v1946, %v1942
    %v2191 = vpack.c.b16 %v1947, %v1943
    %v2192 = vpack.c.b16 %v1948, %v1944
    %v2193 = vpack.c.b16 %v1953, %v1949
    %v2194 = vpack.c.b16 %v1954, %v1950
    %v2195 = vpack.c.b16 %v1955, %v1951
    %v2196 = vpack.c.b16 %v1956, %v1952
    %v2197 = vpack.c.b16 %v1961, %v1957
    %v2198 = vpack.c.b16 %v1962, %v1958
    %v2199 = vpack.c.b16 %v1963, %v1959
    %v2200 = vpack.c.b16 %v1964, %v1960
    %v2201 = vpack.c.b16 %v1969, %v1965
    %v2202 = vpack.c.b16 %v1970, %v1966
    %v2203 = vpack.c.b16 %v1971, %v1967
    %v2204 = vpack.c.b16 %v1972, %v1968
    %v2205 = vpack.c.b16 %v1977, %v1973
    %v2206 = vpack.c.b16 %v1978, %v1974
    %v2207 = vpack.c.b16 %v1979, %v1975
    %v2208 = vpack.c.b16 %v1980, %v1976
    %v2209 = vpack.c.b16 %v1985, %v1981
    %v2210 = vpack.c.b16 %v1986, %v1982
    %v2211 = vpack.c.b16 %v1987, %v1983
    %v2212 = vpack.c.b16 %v1988, %v1984
    %v2213 = vpack.c.b16 %v1993, %v1989
    %v2214 = vpack.c.b16 %v1994, %v1990
    %v2215 = vpack.c.b16 %v1995, %v1991
    %v2216 = vpack.c.b16 %v1996, %v1992
    %v2217 = vpack.c.b16 %v2001, %v1997
    %v2218 = vpack.c.b16 %v2002, %v1998
    %v2219 = vpack.c.b16 %v2003, %v1999
    %v2220 = vpack.c.b16 %v2004, %v2000
    %v2221 = vpack.c.b16 %v2009, %v2005
    %v2222 = vpack.c.b16 %v2010, %v2006
    %v2223 = vpack.c.b16 %v2011, %v2007
    %v2224 = vpack.c.b16 %v2012, %v2008
    %v2225 = vpack.c.b16 %v2017, %v2013
    %v2226 = vpack.c.b16 %v2018, %v2014
    %v2227 = vpack.c.b16 %v2019, %v2015
    %v2228 = vpack.c.b16 %v2020, %v2016
    %v2229 = vpack.c.b16 %v2025, %v2021
    %v2230 = vpack.c.b16 %v2026, %v2022
    %v2231 = vpack.c.b16 %v2027, %v2023
    %v2232 = vpack.c.b16 %v2028, %v2024
    %v2233 = vpack.c.b16 %v2033, %v2029
    %v2234 = vpack.c.b16 %v2034, %v2030
    %v2235 = vpack.c.b16 %v2035, %v2031
    %v2236 = vpack.c.b16 %v2036, %v2032
    %v2237 = vpack.c.b16 %v2041, %v2037
    %v2238 = vpack.c.b16 %v2042, %v2038
    %v2239 = vpack.c.b16 %v2043, %v2039
    %v2240 = vpack.c.b16 %v2044, %v2040
    %v2241 = vpack.c.b16 %v2049, %v2045
    %v2242 = vpack.c.b16 %v2050, %v2046
    %v2243 = vpack.c.b16 %v2051, %v2047
    %v2244 = vpack.c.b16 %v2052, %v2048
    %v2245 = vpack.c.b16 %v2057, %v2053
    %v2246 = vpack.c.b16 %v2058, %v2054
    %v2247 = vpack.c.b16 %v2059, %v2055
    %v2248 = vpack.c.b16 %v2060, %v2056
    %v2249 = vpack.c.b16 %v2065, %v2061
    %v2250 = vpack.c.b16 %v2066, %v2062
    %v2251 = vpack.c.b16 %v2067, %v2063
    %v2252 = vpack.c.b16 %v2068, %v2064
    %v2253 = vpack.c.b16 %v2073, %v2069
    %v2254 = vpack.c.b16 %v2074, %v2070
    %v2255 = vpack.c.b16 %v2075, %v2071
    %v2256 = vpack.c.b16 %v2076, %v2072
    %v2257 = vpack.c.b16 %v2081, %v2077
    %v2258 = vpack.c.b16 %v2082, %v2078
    %v2259 = vpack.c.b16 %v2083, %v2079
    %v2260 = vpack.c.b16 %v2084, %v2080
    %v2261 = vpack.c.b16 %v2089, %v2085
    %v2262 = vpack.c.b16 %v2090, %v2086
    %v2263 = vpack.c.b16 %v2091, %v2087
    %v2264 = vpack.c.b16 %v2092, %v2088
    %v2265 = vpack.c.b16 %v2097, %v2093
    %v2266 = vpack.c.b16 %v2098, %v2094
    %v2267 = vpack.c.b16 %v2099, %v2095
    %v2268 = vpack.c.b16 %v2100, %v2096
    %v2269 = vpack.c.b16 %v2105, %v2101
    %v2270 = vpack.c.b16 %v2106, %v2102
    %v2271 = vpack.c.b16 %v2107, %v2103
    %v2272 = vpack.c.b16 %v2108, %v2104
    %v2273 = vpack.c.b16 %v2113, %v2109
    %v2274 = vpack.c.b16 %v2114, %v2110
    %v2275 = vpack.c.b16 %v2115, %v2111
    %v2276 = vpack.c.b16 %v2116, %v2112
    %v2277 = vpack.c.b16 %v2121, %v2117
    %v2278 = vpack.c.b16 %v2122, %v2118
    %v2279 = vpack.c.b16 %v2123, %v2119
    %v2280 = vpack.c.b16 %v2124, %v2120
    %v2281 = vpack.c.b16 %v2129, %v2125
    %v2282 = vpack.c.b16 %v2130, %v2126
    %v2283 = vpack.c.b16 %v2131, %v2127
    %v2284 = vpack.c.b16 %v2132, %v2128
    %v2285 = vpack.c.b16 %v2137, %v2133
    %v2286 = vpack.c.b16 %v2138, %v2134
    %v2287 = vpack.c.b16 %v2139, %v2135
    %v2288 = vpack.c.b16 %v2140, %v2136
    %v2289 = vpack.c.b16 %v2145, %v2141
    %v2290 = vpack.c.b16 %v2146, %v2142
    %v2291 = vpack.c.b16 %v2147, %v2143
    %v2292 = vpack.c.b16 %v2148, %v2144
    %v2293 = vpack.c.b16 %v2153, %v2149
    %v2294 = vpack.c.b16 %v2154, %v2150
    %v2295 = vpack.c.b16 %v2155, %v2151
    %v2296 = vpack.c.b16 %v2156, %v2152
    %v2297 = vpack.c.b16 %v2161, %v2157
    %v2298 = vpack.c.b16 %v2162, %v2158
    %v2299 = vpack.c.b16 %v2163, %v2159
    %v2300 = vpack.c.b16 %v2164, %v2160
    %v2301 = vpack.c.b16 %v2169, %v2165
    %v2302 = vpack.c.b16 %v2170, %v2166
    %v2303 = vpack.c.b16 %v2171, %v2167
    %v2304 = vpack.c.b16 %v2172, %v2168
    %v2305 = vpack.c.b16 %v2177, %v2173
    %v2306 = vpack.c.b16 %v2178, %v2174
    %v2307 = vpack.c.b16 %v2179, %v2175
    %v2308 = vpack.c.b16 %v2180, %v2176
    %2437 = vmatprep.subr.bf16.mxu0 %v2182
    %2438 = vmatpush1.bf16.msra.mxu0 %v2181
    %2439 = vmatprep.subr.bf16.mxu0 %v2186
    %2440 = vmatpush1.bf16.msra.mxu0 %v2185
    %2441 = vmatprep.subr.bf16.mxu0 %v2190
    %2442 = vmatpush1.bf16.msra.mxu0 %v2189
    %2443 = vmatprep.subr.bf16.mxu0 %v2194
    %2444 = vmatpush1.bf16.msra.mxu0 %v2193
    %2445 = vmatprep.subr.bf16.mxu0 %v2198
    %2446 = vmatpush1.bf16.msra.mxu0 %v2197
    %2447 = vmatprep.subr.bf16.mxu0 %v2202
    %2448 = vmatpush1.bf16.msra.mxu0 %v2201
    %2449 = vmatprep.subr.bf16.mxu0 %v2206
    %2450 = vmatpush1.bf16.msra.mxu0 %v2205
    %2451 = vmatprep.subr.bf16.mxu0 %v2210
    %2452 = vmatpush1.bf16.msra.mxu0 %v2209
    %2453 = vmatprep.subr.bf16.mxu0 %v2214
    %2454 = vmatpush1.bf16.msra.mxu0 %v2213
    %2455 = vmatprep.subr.bf16.mxu0 %v2218
    %2456 = vmatpush1.bf16.msra.mxu0 %v2217
    %2457 = vmatprep.subr.bf16.mxu0 %v2222
    %2458 = vmatpush1.bf16.msra.mxu0 %v2221
    %2459 = vmatprep.subr.bf16.mxu0 %v2226
    %2460 = vmatpush1.bf16.msra.mxu0 %v2225
    %2461 = vmatprep.subr.bf16.mxu0 %v2230
    %2462 = vmatpush1.bf16.msra.mxu0 %v2229
    %2463 = vmatprep.subr.bf16.mxu0 %v2234
    %2464 = vmatpush1.bf16.msra.mxu0 %v2233
    %2465 = vmatprep.subr.bf16.mxu0 %v2238
    %2466 = vmatpush1.bf16.msra.mxu0 %v2237
    %2467 = vmatprep.subr.bf16.mxu0 %v2242
    %2468 = vmatpush1.bf16.msra.mxu0 %v2241
    %2469 = vmatprep.mubr.bf16.mxu0 %v1644
    %2470 = vmatmul.mubr.bf16.gmra.mrb[0].mxu0 %v1643
    %v2471 = vpop.f32.mrb[0].mxu0
    %v2472 = vadd.f32 %v1780, %v2471
    %v2473 = vpop.f32.mrb[0].mxu0
    %v2474 = vadd.f32 %v1784, %v2473
    %v2475 = vpop.f32.mrb[0].mxu0
    %v2476 = vadd.f32 %v1780, %v2475
    %v2477 = vpop.f32.mrb[0].mxu0
    %v2478 = vadd.f32 %v1784, %v2477
    %2479 = vdwg.mxu0
    %2480 = vmatprep.subr.bf16.mxu0 %v2246
    %2481 = vmatpush1.bf16.msra.mxu0 %v2245
    %2482 = vmatprep.subr.bf16.mxu0 %v2250
    %2483 = vmatpush1.bf16.msra.mxu0 %v2249
    %2484 = vmatprep.subr.bf16.mxu0 %v2254
    %2485 = vmatpush1.bf16.msra.mxu0 %v2253
    %2486 = vmatprep.subr.bf16.mxu0 %v2258
    %2487 = vmatpush1.bf16.msra.mxu0 %v2257
    %2488 = vmatprep.subr.bf16.mxu0 %v2262
    %2489 = vmatpush1.bf16.msra.mxu0 %v2261
    %2490 = vmatprep.subr.bf16.mxu0 %v2266
    %2491 = vmatpush1.bf16.msra.mxu0 %v2265
    %2492 = vmatprep.subr.bf16.mxu0 %v2270
    %2493 = vmatpush1.bf16.msra.mxu0 %v2269
    %2494 = vmatprep.subr.bf16.mxu0 %v2274
    %2495 = vmatpush1.bf16.msra.mxu0 %v2273
    %2496 = vmatprep.subr.bf16.mxu0 %v2278
    %2497 = vmatpush1.bf16.msra.mxu0 %v2277
    %2498 = vmatprep.subr.bf16.mxu0 %v2282
    %2499 = vmatpush1.bf16.msra.mxu0 %v2281
    %2500 = vmatprep.subr.bf16.mxu0 %v2286
    %2501 = vmatpush1.bf16.msra.mxu0 %v2285
    %2502 = vmatprep.subr.bf16.mxu0 %v2290
    %2503 = vmatpush1.bf16.msra.mxu0 %v2289
    %2504 = vmatprep.subr.bf16.mxu0 %v2294
    %2505 = vmatpush1.bf16.msra.mxu0 %v2293
    %2506 = vmatprep.subr.bf16.mxu0 %v2298
    %2507 = vmatpush1.bf16.msra.mxu0 %v2297
    %2508 = vmatprep.subr.bf16.mxu0 %v2302
    %2509 = vmatpush1.bf16.msra.mxu0 %v2301
    %2510 = vmatprep.subr.bf16.mxu0 %v2306
    %2511 = vmatpush1.bf16.msra.mxu0 %v2305
    %2512 = vmatprep.mubr.bf16.mxu0 %v1646
    %2513 = vmatmul.mubr.bf16.gmra.mrb[0].mxu0 %v1645
    %v2514 = vpop.f32.mrb[0].mxu0
    %v2515 = vadd.f32 %v2472, %v2514
    %v2516 = vpop.f32.mrb[0].mxu0
    %v2517 = vadd.f32 %v2474, %v2516
    %v2518 = vpop.f32.mrb[0].mxu0
    %v2519 = vadd.f32 %v2476, %v2518
    %v2520 = vpop.f32.mrb[0].mxu0
    %v2521 = vadd.f32 %v2478, %v2520
    %2522 = vdwg.mxu0
    %2523 = vmatprep.subr.bf16.mxu0 %v2184
    %2524 = vmatpush1.bf16.msra.mxu0 %v2183
    %2525 = vmatprep.subr.bf16.mxu0 %v2188
    %2526 = vmatpush1.bf16.msra.mxu0 %v2187
    %2527 = vmatprep.subr.bf16.mxu0 %v2192
    %2528 = vmatpush1.bf16.msra.mxu0 %v2191
    %2529 = vmatprep.subr.bf16.mxu0 %v2196
    %2530 = vmatpush1.bf16.msra.mxu0 %v2195
    %2531 = vmatprep.subr.bf16.mxu0 %v2200
    %2532 = vmatpush1.bf16.msra.mxu0 %v2199
    %2533 = vmatprep.subr.bf16.mxu0 %v2204
    %2534 = vmatpush1.bf16.msra.mxu0 %v2203
    %2535 = vmatprep.subr.bf16.mxu0 %v2208
    %2536 = vmatpush1.bf16.msra.mxu0 %v2207
    %2537 = vmatprep.subr.bf16.mxu0 %v2212
    %2538 = vmatpush1.bf16.msra.mxu0 %v2211
    %2539 = vmatprep.subr.bf16.mxu0 %v2216
    %2540 = vmatpush1.bf16.msra.mxu0 %v2215
    %2541 = vmatprep.subr.bf16.mxu0 %v2220
    %2542 = vmatpush1.bf16.msra.mxu0 %v2219
    %2543 = vmatprep.subr.bf16.mxu0 %v2224
    %2544 = vmatpush1.bf16.msra.mxu0 %v2223
    %2545 = vmatprep.subr.bf16.mxu0 %v2228
    %2546 = vmatpush1.bf16.msra.mxu0 %v2227
    %2547 = vmatprep.subr.bf16.mxu0 %v2232
    %2548 = vmatpush1.bf16.msra.mxu0 %v2231
    %2549 = vmatprep.subr.bf16.mxu0 %v2236
    %2550 = vmatpush1.bf16.msra.mxu0 %v2235
    %2551 = vmatprep.subr.bf16.mxu0 %v2240
    %2552 = vmatpush1.bf16.msra.mxu0 %v2239
    %2553 = vmatprep.subr.bf16.mxu0 %v2244
    %2554 = vmatpush1.bf16.msra.mxu0 %v2243
    %2555 = vmatprep.mubr.bf16.mxu0 %v1644
    %2556 = vmatmul.mubr.bf16.gmra.mrb[0].mxu0 %v1643
    %v2557 = vpop.f32.mrb[0].mxu0
    %v2558 = vadd.f32 %v1788, %v2557
    %v2559 = vpop.f32.mrb[0].mxu0
    %v2560 = vadd.f32 %v1792, %v2559
    %v2561 = vpop.f32.mrb[0].mxu0
    %v2562 = vadd.f32 %v1788, %v2561
    %v2563 = vpop.f32.mrb[0].mxu0
    %v2564 = vadd.f32 %v1792, %v2563
    %2565 = vdwg.mxu0
    %2566 = vmatprep.subr.bf16.mxu0 %v2248
    %2567 = vmatpush1.bf16.msra.mxu0 %v2247
    %2568 = vmatprep.subr.bf16.mxu0 %v2252
    %2569 = vmatpush1.bf16.msra.mxu0 %v2251
    %2570 = vmatprep.subr.bf16.mxu0 %v2256
    %2571 = vmatpush1.bf16.msra.mxu0 %v2255
    %2572 = vmatprep.subr.bf16.mxu0 %v2260
    %2573 = vmatpush1.bf16.msra.mxu0 %v2259
    %2574 = vmatprep.subr.bf16.mxu0 %v2264
    %2575 = vmatpush1.bf16.msra.mxu0 %v2263
    %2576 = vmatprep.subr.bf16.mxu0 %v2268
    %2577 = vmatpush1.bf16.msra.mxu0 %v2267
    %2578 = vmatprep.subr.bf16.mxu0 %v2272
    %2579 = vmatpush1.bf16.msra.mxu0 %v2271
    %2580 = vmatprep.subr.bf16.mxu0 %v2276
    %2581 = vmatpush1.bf16.msra.mxu0 %v2275
    %2582 = vmatprep.subr.bf16.mxu0 %v2280
    %2583 = vmatpush1.bf16.msra.mxu0 %v2279
    %2584 = vmatprep.subr.bf16.mxu0 %v2284
    %2585 = vmatpush1.bf16.msra.mxu0 %v2283
    %2586 = vmatprep.subr.bf16.mxu0 %v2288
    %2587 = vmatpush1.bf16.msra.mxu0 %v2287
    %2588 = vmatprep.subr.bf16.mxu0 %v2292
    %2589 = vmatpush1.bf16.msra.mxu0 %v2291
    %2590 = vmatprep.subr.bf16.mxu0 %v2296
    %2591 = vmatpush1.bf16.msra.mxu0 %v2295
    %2592 = vmatprep.subr.bf16.mxu0 %v2300
    %2593 = vmatpush1.bf16.msra.mxu0 %v2299
    %2594 = vmatprep.subr.bf16.mxu0 %v2304
    %2595 = vmatpush1.bf16.msra.mxu0 %v2303
    %2596 = vmatprep.subr.bf16.mxu0 %v2308
    %2597 = vmatpush1.bf16.msra.mxu0 %v2307
    %2598 = vmatprep.mubr.bf16.mxu0 %v1646
    %2599 = vmatmul.mubr.bf16.gmra.mrb[0].mxu0 %v1645
    %v2600 = vpop.f32.mrb[0].mxu0
    %v2601 = vadd.f32 %v2558, %v2600
    %v2602 = vpop.f32.mrb[0].mxu0
    %v2603 = vadd.f32 %v2560, %v2602
    %v2604 = vpop.f32.mrb[0].mxu0
    %v2605 = vadd.f32 %v2562, %v2604
    %v2606 = vpop.f32.mrb[0].mxu0
    %v2607 = vadd.f32 %v2564, %v2606
    %2608 = vdwg.mxu0
    %v2609 = vmax.f32 %v2515, 0.0
    %v2610 = vmax.f32 %v2517, 0.0
    %v2611 = vmax.f32 %v2601, 0.0
    %v2612 = vmax.f32 %v2603, 0.0
    %v2613 = vmax.f32 %v2519, 0.0
    %v2614 = vmax.f32 %v2521, 0.0
    %v2615 = vmax.f32 %v2605, 0.0
    %v2616 = vmax.f32 %v2607, 0.0
    %v2617 = vpack.c.bf16 %v2613, %v2609
    %v2618 = vpack.c.bf16 %v2614, %v2610
    %v2619 = vpack.c.bf16 %v2615, %v2611
    %v2620 = vpack.c.bf16 %v2616, %v2612
    %v2621 = vld [vmem:[#allocation6] sm:$0xf]
    %v2622 = vld [vmem:[#allocation6 + $0x4] sm:$0xf]
    %v2623 = vld [vmem:[#allocation6 + $0x8] sm:$0xf]
    %v2624 = vld [vmem:[#allocation6 + $0xc] sm:$0xf]
    %v2625 = vld [vmem:[#allocation6 + $0x10] sm:$0xf]
    %v2626 = vld [vmem:[#allocation6 + $0x14] sm:$0xf]
    %v2627 = vld [vmem:[#allocation6 + $0x18] sm:$0xf]
    %v2628 = vld [vmem:[#allocation6 + $0x1c] sm:$0xf]
    %v2629 = vld [vmem:[#allocation6 + $0x20] sm:$0xf]
    %v2630 = vld [vmem:[#allocation6 + $0x24] sm:$0xf]
    %v2631 = vld [vmem:[#allocation6 + $0x28] sm:$0xf]
    %v2632 = vld [vmem:[#allocation6 + $0x2c] sm:$0xf]
    %v2633 = vld [vmem:[#allocation6 + $0x30] sm:$0xf]
    %v2634 = vld [vmem:[#allocation6 + $0x34] sm:$0xf]
    %v2635 = vld [vmem:[#allocation6 + $0x38] sm:$0xf]
    %v2636 = vld [vmem:[#allocation6 + $0x3c] sm:$0xf]
    %v2637 = vld [vmem:[#allocation6 + $0x40] sm:$0xf]
    %v2638 = vld [vmem:[#allocation6 + $0x44] sm:$0xf]
    %v2639 = vld [vmem:[#allocation6 + $0x48] sm:$0xf]
    %v2640 = vld [vmem:[#allocation6 + $0x4c] sm:$0xf]
    %v2641 = vld [vmem:[#allocation6 + $0x50] sm:$0xf]
    %v2642 = vld [vmem:[#allocation6 + $0x54] sm:$0xf]
    %v2643 = vld [vmem:[#allocation6 + $0x58] sm:$0xf]
    %v2644 = vld [vmem:[#allocation6 + $0x5c] sm:$0xf]
    %v2645 = vld [vmem:[#allocation6 + $0x60] sm:$0xf]
    %v2646 = vld [vmem:[#allocation6 + $0x64] sm:$0xf]
    %v2647 = vld [vmem:[#allocation6 + $0x68] sm:$0xf]
    %v2648 = vld [vmem:[#allocation6 + $0x6c] sm:$0xf]
    %v2649 = vld [vmem:[#allocation6 + $0x70] sm:$0xf]
    %v2650 = vld [vmem:[#allocation6 + $0x74] sm:$0xf]
    %v2651 = vld [vmem:[#allocation6 + $0x78] sm:$0xf]
    %v2652 = vld [vmem:[#allocation6 + $0x7c] sm:$0xf]
    %v2653 = vld [vmem:[#allocation6 + $0x80] sm:$0xf]
    %v2654 = vld [vmem:[#allocation6 + $0x84] sm:$0xf]
    %v2655 = vld [vmem:[#allocation6 + $0x88] sm:$0xf]
    %v2656 = vld [vmem:[#allocation6 + $0x8c] sm:$0xf]
    %v2657 = vld [vmem:[#allocation6 + $0x90] sm:$0xf]
    %v2658 = vld [vmem:[#allocation6 + $0x94] sm:$0xf]
    %v2659 = vld [vmem:[#allocation6 + $0x98] sm:$0xf]
    %v2660 = vld [vmem:[#allocation6 + $0x9c] sm:$0xf]
    %v2661 = vld [vmem:[#allocation6 + $0xa0] sm:$0xf]
    %v2662 = vld [vmem:[#allocation6 + $0xa4] sm:$0xf]
    %v2663 = vld [vmem:[#allocation6 + $0xa8] sm:$0xf]
    %v2664 = vld [vmem:[#allocation6 + $0xac] sm:$0xf]
    %v2665 = vld [vmem:[#allocation6 + $0xb0] sm:$0xf]
    %v2666 = vld [vmem:[#allocation6 + $0xb4] sm:$0xf]
    %v2667 = vld [vmem:[#allocation6 + $0xb8] sm:$0xf]
    %v2668 = vld [vmem:[#allocation6 + $0xbc] sm:$0xf]
    %v2669 = vld [vmem:[#allocation6 + $0xc0] sm:$0xf]
    %v2670 = vld [vmem:[#allocation6 + $0xc4] sm:$0xf]
    %v2671 = vld [vmem:[#allocation6 + $0xc8] sm:$0xf]
    %v2672 = vld [vmem:[#allocation6 + $0xcc] sm:$0xf]
    %v2673 = vld [vmem:[#allocation6 + $0xd0] sm:$0xf]
    %v2674 = vld [vmem:[#allocation6 + $0xd4] sm:$0xf]
    %v2675 = vld [vmem:[#allocation6 + $0xd8] sm:$0xf]
    %v2676 = vld [vmem:[#allocation6 + $0xdc] sm:$0xf]
    %v2677 = vld [vmem:[#allocation6 + $0xe0] sm:$0xf]
    %v2678 = vld [vmem:[#allocation6 + $0xe4] sm:$0xf]
    %v2679 = vld [vmem:[#allocation6 + $0xe8] sm:$0xf]
    %v2680 = vld [vmem:[#allocation6 + $0xec] sm:$0xf]
    %v2681 = vld [vmem:[#allocation6 + $0xf0] sm:$0xf]
    %v2682 = vld [vmem:[#allocation6 + $0xf4] sm:$0xf]
    %v2683 = vld [vmem:[#allocation6 + $0xf8] sm:$0xf]
    %v2684 = vld [vmem:[#allocation6 + $0xfc] sm:$0xf]
    %v2685 = vld [vmem:[%s6] sm:$0x1]
    %v2687 = vlaneseq
    %v2688 = vshrl.u32 %v2687, 7
    %v2689 = vsub.s32 0, %v2688
    %v2690 = vrot.slane %v2685, %v2689
    %v2756 = vunpack.c.l.b16 %v2621
    %v2757 = vunpack.c.l.b16 %v2622
    %v2758 = vunpack.c.l.b16 %v2623
    %v2759 = vunpack.c.l.b16 %v2624
    %v2760 = vunpack.c.l.b16 %v2625
    %v2761 = vunpack.c.l.b16 %v2626
    %v2762 = vunpack.c.l.b16 %v2627
    %v2763 = vunpack.c.l.b16 %v2628
    %v2764 = vunpack.c.l.b16 %v2629
    %v2765 = vunpack.c.l.b16 %v2630
    %v2766 = vunpack.c.l.b16 %v2631
    %v2767 = vunpack.c.l.b16 %v2632
    %v2768 = vunpack.c.l.b16 %v2633
    %v2769 = vunpack.c.l.b16 %v2634
    %v2770 = vunpack.c.l.b16 %v2635
    %v2771 = vunpack.c.l.b16 %v2636
    %v2772 = vunpack.c.l.b16 %v2637
    %v2773 = vunpack.c.l.b16 %v2638
    %v2774 = vunpack.c.l.b16 %v2639
    %v2775 = vunpack.c.l.b16 %v2640
    %v2776 = vunpack.c.l.b16 %v2641
    %v2777 = vunpack.c.l.b16 %v2642
    %v2778 = vunpack.c.l.b16 %v2643
    %v2779 = vunpack.c.l.b16 %v2644
    %v2780 = vunpack.c.l.b16 %v2645
    %v2781 = vunpack.c.l.b16 %v2646
    %v2782 = vunpack.c.l.b16 %v2647
    %v2783 = vunpack.c.l.b16 %v2648
    %v2784 = vunpack.c.l.b16 %v2649
    %v2785 = vunpack.c.l.b16 %v2650
    %v2786 = vunpack.c.l.b16 %v2651
    %v2787 = vunpack.c.l.b16 %v2652
    %v2788 = vunpack.c.l.b16 %v2653
    %v2789 = vunpack.c.l.b16 %v2654
    %v2790 = vunpack.c.l.b16 %v2655
    %v2791 = vunpack.c.l.b16 %v2656
    %v2792 = vunpack.c.l.b16 %v2657
    %v2793 = vunpack.c.l.b16 %v2658
    %v2794 = vunpack.c.l.b16 %v2659
    %v2795 = vunpack.c.l.b16 %v2660
    %v2796 = vunpack.c.l.b16 %v2661
    %v2797 = vunpack.c.l.b16 %v2662
    %v2798 = vunpack.c.l.b16 %v2663
    %v2799 = vunpack.c.l.b16 %v2664
    %v2800 = vunpack.c.l.b16 %v2665
    %v2801 = vunpack.c.l.b16 %v2666
    %v2802 = vunpack.c.l.b16 %v2667
    %v2803 = vunpack.c.l.b16 %v2668
    %v2804 = vunpack.c.l.b16 %v2669
    %v2805 = vunpack.c.l.b16 %v2670
    %v2806 = vunpack.c.l.b16 %v2671
    %v2807 = vunpack.c.l.b16 %v2672
    %v2808 = vunpack.c.l.b16 %v2673
    %v2809 = vunpack.c.l.b16 %v2674
    %v2810 = vunpack.c.l.b16 %v2675
    %v2811 = vunpack.c.l.b16 %v2676
    %v2812 = vunpack.c.l.b16 %v2677
    %v2813 = vunpack.c.l.b16 %v2678
    %v2814 = vunpack.c.l.b16 %v2679
    %v2815 = vunpack.c.l.b16 %v2680
    %v2816 = vunpack.c.l.b16 %v2681
    %v2817 = vunpack.c.l.b16 %v2682
    %v2818 = vunpack.c.l.b16 %v2683
    %v2819 = vunpack.c.l.b16 %v2684
    %v2820 = vpack.c.b16 %v2757, %v2756
    %v2821 = vpack.c.b16 %v2759, %v2758
    %v2822 = vpack.c.b16 %v2761, %v2760
    %v2823 = vpack.c.b16 %v2763, %v2762
    %v2824 = vpack.c.b16 %v2765, %v2764
    %v2825 = vpack.c.b16 %v2767, %v2766
    %v2826 = vpack.c.b16 %v2769, %v2768
    %v2827 = vpack.c.b16 %v2771, %v2770
    %v2828 = vpack.c.b16 %v2773, %v2772
    %v2829 = vpack.c.b16 %v2775, %v2774
    %v2830 = vpack.c.b16 %v2777, %v2776
    %v2831 = vpack.c.b16 %v2779, %v2778
    %v2832 = vpack.c.b16 %v2781, %v2780
    %v2833 = vpack.c.b16 %v2783, %v2782
    %v2834 = vpack.c.b16 %v2785, %v2784
    %v2835 = vpack.c.b16 %v2787, %v2786
    %v2836 = vpack.c.b16 %v2789, %v2788
    %v2837 = vpack.c.b16 %v2791, %v2790
    %v2838 = vpack.c.b16 %v2793, %v2792
    %v2839 = vpack.c.b16 %v2795, %v2794
    %v2840 = vpack.c.b16 %v2797, %v2796
    %v2841 = vpack.c.b16 %v2799, %v2798
    %v2842 = vpack.c.b16 %v2801, %v2800
    %v2843 = vpack.c.b16 %v2803, %v2802
    %v2844 = vpack.c.b16 %v2805, %v2804
    %v2845 = vpack.c.b16 %v2807, %v2806
    %v2846 = vpack.c.b16 %v2809, %v2808
    %v2847 = vpack.c.b16 %v2811, %v2810
    %v2848 = vpack.c.b16 %v2813, %v2812
    %v2849 = vpack.c.b16 %v2815, %v2814
    %v2850 = vpack.c.b16 %v2817, %v2816
    %v2851 = vpack.c.b16 %v2819, %v2818
    %2884 = vmatprep.subr.bf16.mxu0 0
    %2885 = vmatpush1.bf16.msra.mxu0 %v2820
    %2886 = vmatprep.subr.bf16.mxu0 0
    %2887 = vmatpush1.bf16.msra.mxu0 %v2821
    %2888 = vmatprep.subr.bf16.mxu0 0
    %2889 = vmatpush1.bf16.msra.mxu0 %v2822
    %2890 = vmatprep.subr.bf16.mxu0 0
    %2891 = vmatpush1.bf16.msra.mxu0 %v2823
    %2892 = vmatprep.subr.bf16.mxu0 0
    %2893 = vmatpush1.bf16.msra.mxu0 %v2824
    %2894 = vmatprep.subr.bf16.mxu0 0
    %2895 = vmatpush1.bf16.msra.mxu0 %v2825
    %2896 = vmatprep.subr.bf16.mxu0 0
    %2897 = vmatpush1.bf16.msra.mxu0 %v2826
    %2898 = vmatprep.subr.bf16.mxu0 0
    %2899 = vmatpush1.bf16.msra.mxu0 %v2827
    %2900 = vmatprep.subr.bf16.mxu0 0
    %2901 = vmatpush1.bf16.msra.mxu0 %v2828
    %2902 = vmatprep.subr.bf16.mxu0 0
    %2903 = vmatpush1.bf16.msra.mxu0 %v2829
    %2904 = vmatprep.subr.bf16.mxu0 0
    %2905 = vmatpush1.bf16.msra.mxu0 %v2830
    %2906 = vmatprep.subr.bf16.mxu0 0
    %2907 = vmatpush1.bf16.msra.mxu0 %v2831
    %2908 = vmatprep.subr.bf16.mxu0 0
    %2909 = vmatpush1.bf16.msra.mxu0 %v2832
    %2910 = vmatprep.subr.bf16.mxu0 0
    %2911 = vmatpush1.bf16.msra.mxu0 %v2833
    %2912 = vmatprep.subr.bf16.mxu0 0
    %2913 = vmatpush1.bf16.msra.mxu0 %v2834
    %2914 = vmatprep.subr.bf16.mxu0 0
    %2915 = vmatpush1.bf16.msra.mxu0 %v2835
    %2916 = vmatprep.mubr.bf16.mxu0 %v2618
    %2917 = vmatmul.mubr.bf16.gmra.mrb[0].mxu0 %v2617
    %v2918 = vpop.f32.mrb[0].mxu0
    %v2919 = vadd.f32 %v2690, %v2918
    %v2920 = vpop.f32.mrb[0].mxu0
    %v2921 = vpop.f32.mrb[0].mxu0
    %v2922 = vadd.f32 %v2690, %v2921
    %v2923 = vpop.f32.mrb[0].mxu0
    %2924 = vdwg.mxu0
    %2925 = vmatprep.subr.bf16.mxu0 0
    %2926 = vmatpush1.bf16.msra.mxu0 %v2836
    %2927 = vmatprep.subr.bf16.mxu0 0
    %2928 = vmatpush1.bf16.msra.mxu0 %v2837
    %2929 = vmatprep.subr.bf16.mxu0 0
    %2930 = vmatpush1.bf16.msra.mxu0 %v2838
    %2931 = vmatprep.subr.bf16.mxu0 0
    %2932 = vmatpush1.bf16.msra.mxu0 %v2839
    %2933 = vmatprep.subr.bf16.mxu0 0
    %2934 = vmatpush1.bf16.msra.mxu0 %v2840
    %2935 = vmatprep.subr.bf16.mxu0 0
    %2936 = vmatpush1.bf16.msra.mxu0 %v2841
    %2937 = vmatprep.subr.bf16.mxu0 0
    %2938 = vmatpush1.bf16.msra.mxu0 %v2842
    %2939 = vmatprep.subr.bf16.mxu0 0
    %2940 = vmatpush1.bf16.msra.mxu0 %v2843
    %2941 = vmatprep.subr.bf16.mxu0 0
    %2942 = vmatpush1.bf16.msra.mxu0 %v2844
    %2943 = vmatprep.subr.bf16.mxu0 0
    %2944 = vmatpush1.bf16.msra.mxu0 %v2845
    %2945 = vmatprep.subr.bf16.mxu0 0
    %2946 = vmatpush1.bf16.msra.mxu0 %v2846
    %2947 = vmatprep.subr.bf16.mxu0 0
    %2948 = vmatpush1.bf16.msra.mxu0 %v2847
    %2949 = vmatprep.subr.bf16.mxu0 0
    %2950 = vmatpush1.bf16.msra.mxu0 %v2848
    %2951 = vmatprep.subr.bf16.mxu0 0
    %2952 = vmatpush1.bf16.msra.mxu0 %v2849
    %2953 = vmatprep.subr.bf16.mxu0 0
    %2954 = vmatpush1.bf16.msra.mxu0 %v2850
    %2955 = vmatprep.subr.bf16.mxu0 0
    %2956 = vmatpush1.bf16.msra.mxu0 %v2851
    %2957 = vmatprep.mubr.bf16.mxu0 %v2620
    %2958 = vmatmul.mubr.bf16.gmra.mrb[0].mxu0 %v2619
    %v2959 = vpop.f32.mrb[0].mxu0
    %v2960 = vadd.f32 %v2919, %v2959
    %v2961 = vpop.f32.mrb[0].mxu0
    %v2962 = vpop.f32.mrb[0].mxu0
    %v2963 = vadd.f32 %v2922, %v2962
    %v2964 = vpop.f32.mrb[0].mxu0
    %2965 = vdwg.mxu0
    %v2966 = vpack.c.bf16 %v2963, %v2960
    %v2968 = vunpack.c.l.b16 %v2966
    %v2969 = vunpack.c.h.b16 %v2966
    %v2970 = vpack.c.b16 %v2968, %v2968
    %v2971 = vpack.c.b16 %v2969, %v2969
    %2974 = vst [vmem:[%s7] sm:$0xf] %v2970
    %2975 = vst [vmem:[%s7 + $0x4] sm:$0xf] %v2971
    // Predicated region
    $region42: #{_forward.1} parent=1 // pred_check
      _
    $region43: #{_forward.1} parent=1 // pred_check_branch
      %2977 = sbr.rel (0) target = $region45
    $region44: #{_forward.1} parent=1 // pred_region
      _
    $region45: #{_forward.1} parent=1 // pred_fallthru
      _
    // Predicated region
    $region46: #{_forward.1} parent=1 // pred_check
      _
    $region47: #{_forward.1} parent=1 // pred_check_branch
      %2979 = sbr.rel (0) target = $region49
    $region48: #{_forward.1} parent=1 // pred_region
      _
    $region49: #{_forward.1} parent=1 // pred_fallthru
      _
    %2980 = vsyncpa [#allocation3], 1
    %2981 = vsyncpa [#allocation5], 1

</llo_original>
